<compile_context>
chip_gen: v5e
topology: v5e:2x2
jax: 0.10.0
libtpu: 0.0.40
codegen_flags: <defaults>
</compile_context>

<pallas_src>
import functools

import jax
import jax.numpy as jnp
from jax.experimental import pallas as pl
from jax.experimental.pallas import tpu as pltpu

EPS = 1e-5          # torch.nn.LayerNorm default eps
LANE = 128


# ------------------------------------------------------------- small utils ---

def _round_up(v, m):
    return ((v + m - 1) // m) * m


def _pad2(x, r, c, dtype=None):
    x = jnp.pad(x, ((0, r - x.shape[0]), (0, c - x.shape[1])))
    return x if dtype is None else x.astype(dtype)


def _pad_row(v, c, dtype=jnp.float32):
    return jnp.pad(v, (0, c - v.shape[0])).astype(dtype).reshape(1, c)


def _vmem_budget_bytes():
    """80% of physical VMEM (leaves room for compiler scratch / double buffers)."""
    try:
        cap = int(pltpu.get_tpu_info().vmem_capacity_bytes)
    except Exception:
        cap = 64 * 1024 * 1024      # conservative fallback = v7x per-TC VMEM
    return int(cap * 0.8)


VMEM_BUDGET = _vmem_budget_bytes()          # passed as vmem_limit_bytes
FIT_BUDGET = int(VMEM_BUDGET * 0.75)        # threshold for residency / fusion


# ---------------------------------------------------------------- kernels ----

def encoder_xw_kernel(x_ref, we_ref, be_ref, w0_ref, o_ref, acc_ref):
    """T = (X @ We + be) @ W0  — node encoder fused with first conv's XW."""
    k = pl.program_id(1)

    @pl.when(k == 0)
    def _():
        acc_ref[...] = jnp.zeros_like(acc_ref)

    acc_ref[...] += jnp.dot(x_ref[...], we_ref[...],
                            preferred_element_type=jnp.float32)

    @pl.when(k == pl.num_programs(1) - 1)
    def _():
        t = (acc_ref[...] + be_ref[...]).astype(jnp.bfloat16)
        o_ref[...] = jnp.dot(t, w0_ref[...],
                             preferred_element_type=jnp.float32
                             ).astype(o_ref.dtype)


def _make_ln_relu_matmul_kernel(inv_h):
    """H = relu(LayerNorm(X)) @ W + b per row tile (mask precomputed on host)."""
    def kernel(mask_ref, x_ref, g_ref, beta_ref, w_ref, b_ref, o_ref):
        x = x_ref[...]
        mu = jnp.sum(x, axis=-1, keepdims=True) * inv_h       # padded lanes of x are 0
        d = (x - mu) * mask_ref[...]
        var = jnp.sum(d * d, axis=-1, keepdims=True) * inv_h
        h = d * jax.lax.rsqrt(var + EPS) * g_ref[...] + beta_ref[...]
        h = jnp.maximum(h, 0.0)
        # dropout(p=0.1, training=False) -> identity
        out = jnp.dot(h.astype(jnp.bfloat16), w_ref[...],
                      preferred_element_type=jnp.float32) + b_ref[...]
        o_ref[...] = out.astype(o_ref.dtype)
    return kernel


def _make_spmm_kernel(residual, resident_h, tk):
    """O = [X +] A_hat @ H + b, accumulating directly in the resident f32 output.

    grid = (row blocks, reduction blocks); the whole h_pad width is one tile so
    A is streamed from HBM exactly once.  With resident_h, H lives in VMEM for
    the entire grid and is sliced per reduction step.
    """
    def kernel(*refs):
        if residual:
            a_ref, h_ref, x_ref, b_ref, o_ref = refs
        else:
            a_ref, h_ref, b_ref, o_ref = refs
        k = pl.program_id(1)

        @pl.when(k == 0)
        def _():
            o_ref[...] = jnp.zeros_like(o_ref)

        if resident_h:
            hk = h_ref[pl.ds(pl.multiple_of(k * tk, tk), tk), :]
        else:
            hk = h_ref[...]
        o_ref[...] += jnp.dot(a_ref[...], hk, preferred_element_type=jnp.float32)

        @pl.when(k == pl.num_programs(1) - 1)
        def _():
            out = o_ref[...] + b_ref[...]
            if residual:
                out = out + x_ref[...]
            o_ref[...] = out
    return kernel


def _make_fused_layer_kernel(inv_h, tm, n_blocks):
    """One res+ layer fused: x_out = x + A_hat @ (relu(LN(x)) @ W) + b.

    x is VMEM-resident; H is computed once (at i == 0, chunked to bound
    temporaries) into a resident VMEM scratch; A is streamed in row blocks.
    NOTE: the grid axis must be "arbitrary" (sequential) because of the i==0
    scratch initialization.  TODO(synk): for v7x megacore, split the row axis
    into a leading size-2 parallel axis and compute H redundantly per core.
    """
    def kernel(mask_ref, x_ref, g_ref, beta_ref, w_ref, b_ref, a_ref, o_ref,
               h_vmem):
        i = pl.program_id(0)

        @pl.when(i == 0)
        def _():
            @pl.loop(0, n_blocks)
            def _(c):
                off = pl.multiple_of(c * tm, tm)
                xc = x_ref[pl.ds(off, tm), :]
                mu = jnp.sum(xc, axis=-1, keepdims=True) * inv_h
                d = (xc - mu) * mask_ref[...]
                var = jnp.sum(d * d, axis=-1, keepdims=True) * inv_h
                h = d * jax.lax.rsqrt(var + EPS) * g_ref[...] + beta_ref[...]
                h = jnp.maximum(h, 0.0)
                h_vmem[pl.ds(off, tm), :] = jnp.dot(
                    h.astype(jnp.bfloat16), w_ref[...],
                    preferred_element_type=jnp.float32).astype(jnp.bfloat16)

        off_i = pl.multiple_of(i * tm, tm)
        xi = x_ref[pl.ds(off_i, tm), :]
        o_ref[...] = (xi + b_ref[...]
                      + jnp.dot(a_ref[...], h_vmem[...],
                                preferred_element_type=jnp.float32)
                      ).astype(o_ref.dtype)
    return kernel


# --------------------------------------------------------------- wrappers ----

def pallas_encoder_xw(x, enc_w, enc_b, w0, *, tm, tkf):
    n_pad, f_pad = x.shape
    h_pad = w0.shape[1]
    grid = (n_pad // tm, f_pad // tkf)
    return pl.pallas_call(
        encoder_xw_kernel,
        out_shape=jax.ShapeDtypeStruct((n_pad, h_pad), jnp.bfloat16),
        grid_spec=pltpu.PrefetchScalarGridSpec(
            num_scalar_prefetch=0,
            grid=grid,
            in_specs=[
                pl.BlockSpec((tm, tkf), lambda i, k: (i, k)),
                pl.BlockSpec((tkf, h_pad), lambda i, k: (k, 0)),
                pl.BlockSpec((1, h_pad), lambda i, k: (0, 0)),
                pl.BlockSpec((h_pad, h_pad), lambda i, k: (0, 0)),
            ],
            out_specs=pl.BlockSpec((tm, h_pad), lambda i, k: (i, 0)),
            scratch_shapes=[pltpu.VMEM((tm, h_pad), jnp.float32)],
        ),
        compiler_params=pltpu.CompilerParams(
            dimension_semantics=("parallel", "arbitrary"),
            vmem_limit_bytes=VMEM_BUDGET),
    )(x, enc_w, enc_b, w0)


def pallas_ln_relu_matmul(mask, x, gamma, beta, w, b, *, hidden, out_dtype, tm):
    n_pad, h_pad = x.shape
    cout = w.shape[1]
    kernel = _make_ln_relu_matmul_kernel(1.0 / float(hidden))
    return pl.pallas_call(
        kernel,
        out_shape=jax.ShapeDtypeStruct((n_pad, cout), out_dtype),
        grid_spec=pltpu.PrefetchScalarGridSpec(
            num_scalar_prefetch=0,
            grid=(n_pad // tm,),
            in_specs=[
                pl.BlockSpec((1, h_pad), lambda i: (0, 0)),      # lane mask
                pl.BlockSpec((tm, h_pad), lambda i: (i, 0)),
                pl.BlockSpec((1, h_pad), lambda i: (0, 0)),
                pl.BlockSpec((1, h_pad), lambda i: (0, 0)),
                pl.BlockSpec((h_pad, cout), lambda i: (0, 0)),
                pl.BlockSpec((1, cout), lambda i: (0, 0)),
            ],
            out_specs=pl.BlockSpec((tm, cout), lambda i: (i, 0)),
        ),
        compiler_params=pltpu.CompilerParams(
            dimension_semantics=("parallel",),
            vmem_limit_bytes=VMEM_BUDGET),
    )(mask, x, gamma, beta, w, b)


def pallas_spmm(a, h, b, *, x_res=None, tm, tk, resident_h):
    """out = [x_res +] A_hat @ H + b; A streamed once (full-width output tile)."""
    n_pad = a.shape[0]
    h_pad = h.shape[1]
    grid = (n_pad // tm, n_pad // tk)
    kernel = _make_spmm_kernel(residual=x_res is not None,
                               resident_h=resident_h, tk=tk)

    a_spec = pl.BlockSpec((tm, tk), lambda i, k: (i, k))
    if resident_h:
        h_spec = pl.BlockSpec((n_pad, h_pad), lambda i, k: (0, 0))   # resident
    else:
        h_spec = pl.BlockSpec((tk, h_pad), lambda i, k: (k, 0))      # streamed
    b_spec = pl.BlockSpec((1, h_pad), lambda i, k: (0, 0))
    out_spec = pl.BlockSpec((tm, h_pad), lambda i, k: (i, 0))

    in_specs = [a_spec, h_spec]
    args = [a, h]
    if x_res is not None:
        in_specs.append(pl.BlockSpec((tm, h_pad), lambda i, k: (i, 0)))
        args.append(x_res)
    in_specs.append(b_spec)
    args.append(b)

    # TODO(synk): on v5e store the output in bf16 (and/or int8-quantize A_hat)
    # to cut HBM traffic further; kept f32 here for residual-accumulation safety.
    return pl.pallas_call(
        kernel,
        out_shape=jax.ShapeDtypeStruct((n_pad, h_pad), jnp.float32),
        grid_spec=pltpu.PrefetchScalarGridSpec(
            num_scalar_prefetch=0,
            grid=grid,
            in_specs=in_specs,
            out_specs=out_spec,
        ),
        compiler_params=pltpu.CompilerParams(
            dimension_semantics=("parallel", "arbitrary"),
            vmem_limit_bytes=VMEM_BUDGET),
    )(*args)


def pallas_fused_res_layer(mask, x, gamma, beta, w, b, a, *, hidden, tm):
    n_pad, h_pad = x.shape
    n_blocks = n_pad // tm
    kernel = _make_fused_layer_kernel(1.0 / float(hidden), tm, n_blocks)
    return pl.pallas_call(
        kernel,
        out_shape=jax.ShapeDtypeStruct((n_pad, h_pad), jnp.float32),
        grid_spec=pltpu.PrefetchScalarGridSpec(
            num_scalar_prefetch=0,
            grid=(n_blocks,),
            in_specs=[
                pl.BlockSpec((1, h_pad), lambda i: (0, 0)),        # lane mask
                pl.BlockSpec((n_pad, h_pad), lambda i: (0, 0)),    # x resident
                pl.BlockSpec((1, h_pad), lambda i: (0, 0)),        # gamma
                pl.BlockSpec((1, h_pad), lambda i: (0, 0)),        # beta
                pl.BlockSpec((h_pad, h_pad), lambda i: (0, 0)),    # W
                pl.BlockSpec((1, h_pad), lambda i: (0, 0)),        # bias
                pl.BlockSpec((tm, n_pad), lambda i: (i, 0)),       # A row block
            ],
            out_specs=pl.BlockSpec((tm, h_pad), lambda i: (i, 0)),
            scratch_shapes=[pltpu.VMEM((n_pad, h_pad), jnp.bfloat16)],
        ),
        compiler_params=pltpu.CompilerParams(
            dimension_semantics=("arbitrary",),   # scratch filled at i == 0
            vmem_limit_bytes=VMEM_BUDGET),
    )(mask, x, gamma, beta, w, b, a)


# --------------------------------------------------------- VMEM estimators ---

def _spmm_vmem_bytes(n_pad, h_pad, tm, tk, resident_h, residual):
    b = 2 * tm * tk * 2 + 2 * tm * h_pad * 4            # A block + out block
    b += 2 * n_pad * h_pad * 2 if resident_h else 2 * tk * h_pad * 2
    if residual:
        b += 2 * tm * h_pad * 4
    return b


def _fused_vmem_bytes(n_pad, h_pad, tm):
    return (2 * n_pad * h_pad * 4        # x resident
            + n_pad * h_pad * 2          # H scratch
            + 2 * tm * n_pad * 2         # A row block
            + 2 * tm * h_pad * 4         # out block
            + 2 * h_pad * h_pad * 2      # W
            + 8 * tm * h_pad * 4)        # LN temporaries headroom


def _plan_tiles(n, f, hidden):
    h_pad = _round_up(hidden, LANE)
    if h_pad > LANE:                      # fill the 256x256 MXU on v6e/v7x
        h_pad = _round_up(h_pad, 256)
    n128 = _round_up(n, LANE)
    # Measured Pallas roofline: 128 tiles ~29%, 256 ~63%, 512 ~85%, 1024 ~86%.
    desired = 1024 if n128 >= 8192 else 512
    tm = 128
    for cand in (desired, 512, 256, 128):
        c = min(cand, n128)
        if _spmm_vmem_bytes(_round_up(n128, c), h_pad, c, c,
                            resident_h=False, residual=True) <= FIT_BUDGET:
            tm = c
            break
    tk = tm
    n_pad = _round_up(n, tm)              # pad N up to the tile (no 128 fallback)
    f_pad = _round_up(f, LANE)
    tkf = 128
    for cand in (512, 256):
        if f_pad % cand == 0:
            tkf = cand
            break
    return n_pad, f_pad, h_pad, tm, tk, tkf


# ------------------------------------------------------------ GCN adjacency --

def gcn_norm_dense(edge_index, edge_weight, num_nodes):
    """Dense A_hat = D^{-1/2} (A + I) D^{-1/2} matching PyG gcn_norm.

    Uses add_remaining_self_loops semantics: a weight-1 self loop is added only
    for nodes that do not already have one.
    """
    # TODO(synk): for realistic sparse graphs replace this dense O(N^2) build
    # with a block-sparse SpMM driven by PrefetchScalarGridSpec block indices.
    src, dst = edge_index[0], edge_index[1]
    is_loop = (src == dst).astype(edge_weight.dtype)
    has_loop = jnp.zeros((num_nodes,), edge_weight.dtype).at[dst].max(is_loop)
    loop = jnp.arange(num_nodes, dtype=src.dtype)
    src = jnp.concatenate([src, loop])
    dst = jnp.concatenate([dst, loop])
    w = jnp.concatenate([edge_weight, 1.0 - has_loop])
    deg = jnp.zeros((num_nodes,), w.dtype).at[dst].add(w)
    dinv = jnp.where(deg > 0, jax.lax.rsqrt(deg), 0.0)
    norm = dinv[src] * w * dinv[dst]
    a = jnp.zeros((num_nodes, num_nodes), w.dtype).at[dst, src].add(norm)
    return a


# ------------------------------------------------------------------ model ----

def init_params(key, num_features, hidden, num_classes, num_layers):
    keys = jax.random.split(key, 2 * num_layers + 4)
    params = {
        "enc_w": jax.random.normal(keys[0], (num_features, hidden), jnp.float32)
        * (1.0 / jnp.sqrt(num_features)),
        "enc_b": jax.random.normal(keys[1], (hidden,), jnp.float32) * 0.01,
        "lin_w": jax.random.normal(keys[2], (hidden, num_classes), jnp.float32)
        * (1.0 / jnp.sqrt(hidden)),
        "lin_b": jax.random.normal(keys[3], (num_classes,), jnp.float32) * 0.01,
        "conv_w": [],
        "conv_b": [],
        "ln_g": [],
        "ln_b": [],
    }
    for i in range(num_layers):
        params["conv_w"].append(
            jax.random.normal(keys[4 + 2 * i], (hidden, hidden), jnp.float32)
            * (1.0 / jnp.sqrt(hidden)))
        params["conv_b"].append(jnp.zeros((hidden,), jnp.float32))
        params["ln_g"].append(jnp.ones((hidden,), jnp.float32))
        params["ln_b"].append(jnp.zeros((hidden,), jnp.float32))
    return params


@functools.partial(jax.jit, static_argnames=("num_layers", "layer_mode"))
def deepgcn_forward(params, x, edge_index, edge_attr, num_layers,
                    layer_mode="auto"):
    n, f = x.shape
    hidden = params["enc_w"].shape[1]
    ncls = params["lin_w"].shape[1]

    n_pad, f_pad, h_pad, tm, tk, tkf = _plan_tiles(n, f, hidden)
    c_pad = _round_up(ncls, LANE)

    # dense normalized adjacency (scatter glue in plain JAX), zero-padded, bf16
    a = gcn_norm_dense(edge_index, edge_attr, n)
    a = _pad2(a, n_pad, n_pad, jnp.bfloat16)

    xp = _pad2(x, n_pad, f_pad, jnp.bfloat16)
    enc_w = _pad2(params["enc_w"], f_pad, h_pad, jnp.bfloat16)
    enc_b = _pad_row(params["enc_b"], h_pad)
    lin_w = _pad2(params["lin_w"], h_pad, c_pad, jnp.bfloat16)
    lin_b = _pad_row(params["lin_b"], c_pad)
    conv_w = [_pad2(w, h_pad, h_pad, jnp.bfloat16) for w in params["conv_w"]]
    conv_b = [_pad_row(b, h_pad) for b in params["conv_b"]]
    ln_g = [_pad_row(g, h_pad) for g in params["ln_g"]]
    ln_b = [_pad_row(b, h_pad) for b in params["ln_b"]]
    zero_b = jnp.zeros((1, h_pad), jnp.float32)
    mask = (jnp.arange(h_pad) < hidden).astype(jnp.float32).reshape(1, h_pad)

    # execution-plan decisions (static, from shapes + VMEM budget)
    if layer_mode == "auto":
        use_fused = _fused_vmem_bytes(n_pad, h_pad, tm) <= FIT_BUDGET
        resident_h = _spmm_vmem_bytes(n_pad, h_pad, tm, tk,
                                      resident_h=True, residual=True) <= FIT_BUDGET
    elif layer_mode == "resident":
        use_fused, resident_h = False, True
    else:  # "streamed"
        use_fused, resident_h = False, False

    # x = node_encoder(x); T0 = x @ W_conv0   (fused encoder + first conv XW)
    t = pallas_encoder_xw(xp, enc_w, enc_b, conv_w[0], tm=tm, tkf=tkf)
    # x = A_hat @ T0 + b0                     (first GCNConv, no residual)
    xh = pallas_spmm(a, t, conv_b[0], x_res=None, tm=tm, tk=tk,
                     resident_h=resident_h)

    # res+ layers: x = x + A_hat @ (relu(LN_i(x)) @ W_i) + b_i
    for i in range(1, num_layers):
        if use_fused:
            xh = pallas_fused_res_layer(mask, xh, ln_g[i], ln_b[i], conv_w[i],
                                        conv_b[i], a, hidden=hidden, tm=tm)
        else:
            h = pallas_ln_relu_matmul(mask, xh, ln_g[i], ln_b[i], conv_w[i],
                                      zero_b, hidden=hidden,
                                      out_dtype=jnp.bfloat16, tm=tm)
            xh = pallas_spmm(a, h, conv_b[i], x_res=xh, tm=tm, tk=tk,
                             resident_h=resident_h)

    # head: relu(LN_0(x)) -> dropout(identity) -> lin
    out = pallas_ln_relu_matmul(mask, xh, ln_g[0], ln_b[0], lin_w, lin_b,
                                hidden=hidden, out_dtype=jnp.float32, tm=tm)
    return out[:n, :ncls]


# ------------------------------------------------------------------- main ----

if __name__ == "__main__":
    NUM_NODES = 32
    NUM_FEATURES = 16
    HIDDEN = 32
    NUM_CLASSES = 8
    NUM_LAYERS = 3
    NUM_EDGES = 64

    key = jax.random.PRNGKey(0)
    k_x, k_e, k_p = jax.random.split(key, 3)

    x = jax.random.normal(k_x, (NUM_NODES, NUM_FEATURES), jnp.float32)
    edge_index = jax.random.randint(
        k_e, (2, NUM_EDGES), 0, NUM_NODES, dtype=jnp.int32)
    edge_attr = jnp.ones((NUM_EDGES,), jnp.float32)   # GCNConv edge_weight

    params = init_params(k_p, NUM_FEATURES, HIDDEN, NUM_CLASSES, NUM_LAYERS)

    # Exercise all three execution plans (fused / resident-H / streamed-H) and
    # check they agree.
    out_auto = deepgcn_forward(params, x, edge_index, edge_attr, NUM_LAYERS,
                               layer_mode="auto")
    out_res = deepgcn_forward(params, x, edge_index, edge_attr, NUM_LAYERS,
                              layer_mode="resident")
    out_str = deepgcn_forward(params, x, edge_index, edge_attr, NUM_LAYERS,
                              layer_mode="streamed")
    out_auto, out_res, out_str = jax.block_until_ready(
        (out_auto, out_res, out_str))

    assert out_auto.shape == (NUM_NODES, NUM_CLASSES)
    assert bool(jnp.all(jnp.isfinite(out_auto)))
    assert bool(jnp.allclose(out_auto, out_res, atol=2e-2, rtol=2e-2))
    assert bool(jnp.allclose(out_auto, out_str, atol=2e-2, rtol=2e-2))
    print("KERNEL_OK")
</pallas_src>

<mosaic_0001>
module attributes {stable_mosaic.version = 11 : i64} {
  func.func @encoder_xw_kernel(%arg0: i32, %arg1: i32, %arg2: memref<128x128xbf16, #tpu.memory_space<vmem>>, %arg3: memref<128x128xbf16, #tpu.memory_space<vmem>>, %arg4: memref<1x128xf32, #tpu.memory_space<vmem>>, %arg5: memref<128x128xbf16, #tpu.memory_space<vmem>>, %arg6: memref<128x128xbf16, #tpu.memory_space<vmem>>, %arg7: memref<128x128xf32, #tpu.memory_space<vmem>>) attributes {dimension_semantics = [#tpu.dimension_semantics<parallel>, #tpu.dimension_semantics<arbitrary>], iteration_bounds = array<i64: 1, 1>, scalar_prefetch = 0 : i64, scratch_operands = 1 : i64, tpu.core_type = #tpu.core_type<tc>, window_params = [{transform_indices = @transform_0, window_bounds = array<i64: 128, 128>}, {transform_indices = @transform_1, window_bounds = array<i64: 128, 128>}, {pipeline_mode = #tpu.pipeline_mode<synchronous>, transform_indices = @transform_2, window_bounds = array<i64: 1, 128>}, {pipeline_mode = #tpu.pipeline_mode<synchronous>, transform_indices = @transform_3, window_bounds = array<i64: 128, 128>}, {transform_indices = @transform_4, window_bounds = array<i64: 128, 128>}]} {
    %c0_i32 = arith.constant 0 : i32
    %0 = arith.cmpi eq, %arg1, %c0_i32 : i32
    %1 = arith.extui %0 : i1 to i32
    %c0_i32_0 = arith.constant 0 : i32
    %2 = arith.cmpi ne, %1, %c0_i32_0 : i32
    scf.if %2 {
      %cst_10 = arith.constant 0.000000e+00 : f32
      %12 = vector.broadcast %cst_10 : f32 to vector<128x128xf32>
      %c0_11 = arith.constant 0 : index
      %c0_12 = arith.constant 0 : index
      %13 = vector.load %arg7[%c0_11, %c0_12] : memref<128x128xf32, #tpu.memory_space<vmem>>, vector<128x128xf32>
      tpu.vector_store %arg7[%c0_11, %c0_12], %12 {strides = array<i32>} : memref<128x128xf32, #tpu.memory_space<vmem>>, vector<128x128xf32>,
    } else {
    }
    %c0 = arith.constant 0 : index
    %c0_1 = arith.constant 0 : index
    %3 = vector.load %arg7[%c0, %c0_1] : memref<128x128xf32, #tpu.memory_space<vmem>>, vector<128x128xf32>
    %c0_2 = arith.constant 0 : index
    %c0_3 = arith.constant 0 : index
    %4 = vector.load %arg2[%c0_2, %c0_3] : memref<128x128xbf16, #tpu.memory_space<vmem>>, vector<128x128xbf16>
    %c0_4 = arith.constant 0 : index
    %c0_5 = arith.constant 0 : index
    %5 = vector.load %arg3[%c0_4, %c0_5] : memref<128x128xbf16, #tpu.memory_space<vmem>>, vector<128x128xbf16>
    %cst = arith.constant dense<0.000000e+00> : vector<128x128xf32>
    %6 = tpu.matmul %4, %5, %cst {dimension_numbers = #tpu.dot_dimension_numbers<[1], [0], [0], [1], [0, 0, 1, 1], [], []>} : vector<128x128xbf16>, vector<128x128xbf16>, vector<128x128xf32> -> vector<128x128xf32>
    %7 = arith.addf %3, %6 : vector<128x128xf32>
    %c0_6 = arith.constant 0 : index
    %c0_7 = arith.constant 0 : index
    %8 = vector.load %arg7[%c0_6, %c0_7] : memref<128x128xf32, #tpu.memory_space<vmem>>, vector<128x128xf32>
    tpu.vector_store %arg7[%c0_6, %c0_7], %7 {strides = array<i32>} : memref<128x128xf32, #tpu.memory_space<vmem>>, vector<128x128xf32>,
    %c0_i32_8 = arith.constant 0 : i32
    %9 = arith.cmpi eq, %arg1, %c0_i32_8 : i32
    %10 = arith.extui %9 : i1 to i32
    %c0_i32_9 = arith.constant 0 : i32
    %11 = arith.cmpi ne, %10, %c0_i32_9 : i32
    scf.if %11 {
      %c0_10 = arith.constant 0 : index
      %c0_11 = arith.constant 0 : index
      %12 = vector.load %arg7[%c0_10, %c0_11] : memref<128x128xf32, #tpu.memory_space<vmem>>, vector<128x128xf32>
      %c0_12 = arith.constant 0 : index
      %c0_13 = arith.constant 0 : index
      %13 = vector.load %arg4[%c0_12, %c0_13] : memref<1x128xf32, #tpu.memory_space<vmem>>, vector<1x128xf32>
      %14 = vector.broadcast %13 : vector<1x128xf32> to vector<128x128xf32>
      %15 = arith.addf %12, %14 : vector<128x128xf32>
      %16 = arith.truncf %15 : vector<128x128xf32> to vector<128x128xbf16>
      %c0_14 = arith.constant 0 : index
      %c0_15 = arith.constant 0 : index
      %17 = vector.load %arg5[%c0_14, %c0_15] : memref<128x128xbf16, #tpu.memory_space<vmem>>, vector<128x128xbf16>
      %cst_16 = arith.constant dense<0.000000e+00> : vector<128x128xf32>
      %18 = tpu.matmul %16, %17, %cst_16 {dimension_numbers = #tpu.dot_dimension_numbers<[1], [0], [0], [1], [0, 0, 1, 1], [], []>} : vector<128x128xbf16>, vector<128x128xbf16>, vector<128x128xf32> -> vector<128x128xf32>
      %19 = arith.truncf %18 : vector<128x128xf32> to vector<128x128xbf16>
      %c0_17 = arith.constant 0 : index
      %c0_18 = arith.constant 0 : index
      %20 = vector.load %arg6[%c0_17, %c0_18] : memref<128x128xbf16, #tpu.memory_space<vmem>>, vector<128x128xbf16>
      tpu.vector_store %arg6[%c0_17, %c0_18], %19 {strides = array<i32>} : memref<128x128xbf16, #tpu.memory_space<vmem>>, vector<128x128xbf16>,
    } else {
    }
    return
  }
  func.func @transform_0(%arg0: i32, %arg1: i32) -> (i32, i32) {
    %c0_i32 = arith.constant 0 : i32
    return %arg0, %arg1 : i32, i32
  }
  func.func @transform_1(%arg0: i32, %arg1: i32) -> (i32, i32) {
    %c0_i32 = arith.constant 0 : i32
    %c0_i32_0 = arith.constant 0 : i32
    return %arg1, %c0_i32 : i32, i32
  }
  func.func @transform_2(%arg0: i32, %arg1: i32) -> (i32, i32) {
    %c0_i32 = arith.constant 0 : i32
    %c0_i32_0 = arith.constant 0 : i32
    %c0_i32_1 = arith.constant 0 : i32
    return %c0_i32, %c0_i32_0 : i32, i32
  }
  func.func @transform_3(%arg0: i32, %arg1: i32) -> (i32, i32) {
    %c0_i32 = arith.constant 0 : i32
    %c0_i32_0 = arith.constant 0 : i32
    %c0_i32_1 = arith.constant 0 : i32
    return %c0_i32, %c0_i32_0 : i32, i32
  }
  func.func @transform_4(%arg0: i32, %arg1: i32) -> (i32, i32) {
    %c0_i32 = arith.constant 0 : i32
    %c0_i32_0 = arith.constant 0 : i32
    return %arg0, %c0_i32 : i32, i32
  }
}

module attributes {stable_mosaic.version = 11 : i64} {
  func.func @kernel(%arg0: i32, %arg1: i32, %arg2: memref<128x128xbf16, #tpu.memory_space<vmem>>, %arg3: memref<128x128xbf16, #tpu.memory_space<vmem>>, %arg4: memref<1x128xf32, #tpu.memory_space<vmem>>, %arg5: memref<128x128xf32, #tpu.memory_space<vmem>>) attributes {dimension_semantics = [#tpu.dimension_semantics<parallel>, #tpu.dimension_semantics<arbitrary>], iteration_bounds = array<i64: 1, 1>, scalar_prefetch = 0 : i64, scratch_operands = 0 : i64, tpu.core_type = #tpu.core_type<tc>, window_params = [{transform_indices = @transform_0, window_bounds = array<i64: 128, 128>}, {pipeline_mode = #tpu.pipeline_mode<synchronous>, transform_indices = @transform_1, window_bounds = array<i64: 128, 128>}, {pipeline_mode = #tpu.pipeline_mode<synchronous>, transform_indices = @transform_2, window_bounds = array<i64: 1, 128>}, {transform_indices = @transform_3, window_bounds = array<i64: 128, 128>}]} {
    %c0_i32 = arith.constant 0 : i32
    %0 = arith.cmpi eq, %arg1, %c0_i32 : i32
    %1 = arith.extui %0 : i1 to i32
    %c0_i32_0 = arith.constant 0 : i32
    %2 = arith.cmpi ne, %1, %c0_i32_0 : i32
    scf.if %2 {
      %cst_9 = arith.constant 0.000000e+00 : f32
      %15 = vector.broadcast %cst_9 : f32 to vector<128x128xf32>
      %c0_10 = arith.constant 0 : index
      %c0_11 = arith.constant 0 : index
      %16 = vector.load %arg5[%c0_10, %c0_11] : memref<128x128xf32, #tpu.memory_space<vmem>>, vector<128x128xf32>
      tpu.vector_store %arg5[%c0_10, %c0_11], %15 {strides = array<i32>} : memref<128x128xf32, #tpu.memory_space<vmem>>, vector<128x128xf32>,
    } else {
    }
    %c128_i32 = arith.constant 128 : i32
    %3 = arith.muli %arg1, %c128_i32 : i32
    %4 = tpu.assume_multiple %3, 128 : i32
    %5 = arith.index_cast %4 : i32 to index
    %c0 = arith.constant 0 : index
    %6 = vector.load %arg3[%5, %c0] : memref<128x128xbf16, #tpu.memory_space<vmem>>, vector<128x128xbf16>
    %c0_1 = arith.constant 0 : index
    %c0_2 = arith.constant 0 : index
    %7 = vector.load %arg5[%c0_1, %c0_2] : memref<128x128xf32, #tpu.memory_space<vmem>>, vector<128x128xf32>
    %c0_3 = arith.constant 0 : index
    %c0_4 = arith.constant 0 : index
    %8 = vector.load %arg2[%c0_3, %c0_4] : memref<128x128xbf16, #tpu.memory_space<vmem>>, vector<128x128xbf16>
    %cst = arith.constant dense<0.000000e+00> : vector<128x128xf32>
    %9 = tpu.matmul %8, %6, %cst {dimension_numbers = #tpu.dot_dimension_numbers<[1], [0], [0], [1], [0, 0, 1, 1], [], []>} : vector<128x128xbf16>, vector<128x128xbf16>, vector<128x128xf32> -> vector<128x128xf32>
    %10 = arith.addf %7, %9 : vector<128x128xf32>
    %c0_5 = arith.constant 0 : index
    %c0_6 = arith.constant 0 : index
    %11 = vector.load %arg5[%c0_5, %c0_6] : memref<128x128xf32, #tpu.memory_space<vmem>>, vector<128x128xf32>
    tpu.vector_store %arg5[%c0_5, %c0_6], %10 {strides = array<i32>} : memref<128x128xf32, #tpu.memory_space<vmem>>, vector<128x128xf32>,
    %c0_i32_7 = arith.constant 0 : i32
    %12 = arith.cmpi eq, %arg1, %c0_i32_7 : i32
    %13 = arith.extui %12 : i1 to i32
    %c0_i32_8 = arith.constant 0 : i32
    %14 = arith.cmpi ne, %13, %c0_i32_8 : i32
    scf.if %14 {
      %c0_9 = arith.constant 0 : index
      %c0_10 = arith.constant 0 : index
      %15 = vector.load %arg5[%c0_9, %c0_10] : memref<128x128xf32, #tpu.memory_space<vmem>>, vector<128x128xf32>
      %c0_11 = arith.constant 0 : index
      %c0_12 = arith.constant 0 : index
      %16 = vector.load %arg4[%c0_11, %c0_12] : memref<1x128xf32, #tpu.memory_space<vmem>>, vector<1x128xf32>
      %17 = vector.broadcast %16 : vector<1x128xf32> to vector<128x128xf32>
      %18 = arith.addf %15, %17 : vector<128x128xf32>
      %c0_13 = arith.constant 0 : index
      %c0_14 = arith.constant 0 : index
      %19 = vector.load %arg5[%c0_13, %c0_14] : memref<128x128xf32, #tpu.memory_space<vmem>>, vector<128x128xf32>
      tpu.vector_store %arg5[%c0_13, %c0_14], %18 {strides = array<i32>} : memref<128x128xf32, #tpu.memory_space<vmem>>, vector<128x128xf32>,
    } else {
    }
    return
  }
  func.func @transform_0(%arg0: i32, %arg1: i32) -> (i32, i32) {
    %c0_i32 = arith.constant 0 : i32
    return %arg0, %arg1 : i32, i32
  }
  func.func @transform_1(%arg0: i32, %arg1: i32) -> (i32, i32) {
    %c0_i32 = arith.constant 0 : i32
    %c0_i32_0 = arith.constant 0 : i32
    %c0_i32_1 = arith.constant 0 : i32
    return %c0_i32, %c0_i32_0 : i32, i32
  }
  func.func @transform_2(%arg0: i32, %arg1: i32) -> (i32, i32) {
    %c0_i32 = arith.constant 0 : i32
    %c0_i32_0 = arith.constant 0 : i32
    %c0_i32_1 = arith.constant 0 : i32
    return %c0_i32, %c0_i32_0 : i32, i32
  }
  func.func @transform_3(%arg0: i32, %arg1: i32) -> (i32, i32) {
    %c0_i32 = arith.constant 0 : i32
    %c0_i32_0 = arith.constant 0 : i32
    return %arg0, %c0_i32 : i32, i32
  }
}

module attributes {stable_mosaic.version = 11 : i64} {
  func.func @kernel(%arg0: i32, %arg1: memref<1x128xf32, #tpu.memory_space<vmem>>, %arg2: memref<128x128xf32, #tpu.memory_space<vmem>>, %arg3: memref<1x128xf32, #tpu.memory_space<vmem>>, %arg4: memref<1x128xf32, #tpu.memory_space<vmem>>, %arg5: memref<128x128xbf16, #tpu.memory_space<vmem>>, %arg6: memref<1x128xf32, #tpu.memory_space<vmem>>, %arg7: memref<128x128xbf16, #tpu.memory_space<vmem>>, %arg8: memref<128x128xf32, #tpu.memory_space<vmem>>, %arg9: memref<128x128xbf16, #tpu.memory_space<vmem>>) attributes {dimension_semantics = [#tpu.dimension_semantics<arbitrary>], iteration_bounds = array<i64: 1>, scalar_prefetch = 0 : i64, scratch_operands = 1 : i64, tpu.core_type = #tpu.core_type<tc>, window_params = [{pipeline_mode = #tpu.pipeline_mode<synchronous>, transform_indices = @transform_0, window_bounds = array<i64: 1, 128>}, {pipeline_mode = #tpu.pipeline_mode<synchronous>, transform_indices = @transform_1, window_bounds = array<i64: 128, 128>}, {pipeline_mode = #tpu.pipeline_mode<synchronous>, transform_indices = @transform_2, window_bounds = array<i64: 1, 128>}, {pipeline_mode = #tpu.pipeline_mode<synchronous>, transform_indices = @transform_3, window_bounds = array<i64: 1, 128>}, {pipeline_mode = #tpu.pipeline_mode<synchronous>, transform_indices = @transform_4, window_bounds = array<i64: 128, 128>}, {pipeline_mode = #tpu.pipeline_mode<synchronous>, transform_indices = @transform_5, window_bounds = array<i64: 1, 128>}, {transform_indices = @transform_6, window_bounds = array<i64: 128, 128>}, {transform_indices = @transform_7, window_bounds = array<i64: 128, 128>}]} {
    %c0_i32 = arith.constant 0 : i32
    %0 = arith.cmpi eq, %arg0, %c0_i32 : i32
    %1 = arith.extui %0 : i1 to i32
    %c0_i32_0 = arith.constant 0 : i32
    %2 = arith.cmpi ne, %1, %c0_i32_0 : i32
    scf.if %2 {
      %c0_i32_9 = arith.constant 0 : i32
      %c1_i32 = arith.constant 1 : i32
      %15 = arith.muli %c0_i32_9, %c1_i32 : i32
      %c0_i32_10 = arith.constant 0 : i32
      %16 = arith.addi %c0_i32_10, %15 : i32
      %c128_i32_11 = arith.constant 128 : i32
      %17 = arith.muli %16, %c128_i32_11 : i32
      %18 = tpu.assume_multiple %17, 128 : i32
      %19 = arith.index_cast %18 : i32 to index
      %c0_12 = arith.constant 0 : index
      %20 = vector.load %arg2[%19, %c0_12] : memref<128x128xf32, #tpu.memory_space<vmem>>, vector<128x128xf32>
      %cst_13 = arith.constant dense<0.000000e+00> : vector<128xf32>
      %21 = vector.multi_reduction <add>, %20, %cst_13 [1] : vector<128x128xf32> to vector<128xf32>
      %22 = vector.shape_cast %21 : vector<128xf32> to vector<128x1xf32>
      %cst_14 = arith.constant 3.125000e-02 : f32
      %23 = vector.broadcast %cst_14 : f32 to vector<128x1xf32>
      %24 = arith.mulf %22, %23 : vector<128x1xf32>
      %25 = vector.broadcast %24 : vector<128x1xf32> to vector<128x128xf32>
      %26 = arith.subf %20, %25 : vector<128x128xf32>
      %c0_15 = arith.constant 0 : index
      %c0_16 = arith.constant 0 : index
      %27 = vector.load %arg1[%c0_15, %c0_16] : memref<1x128xf32, #tpu.memory_space<vmem>>, vector<1x128xf32>
      %28 = vector.broadcast %27 : vector<1x128xf32> to vector<128x128xf32>
      %29 = arith.mulf %26, %28 : vector<128x128xf32>
      %30 = arith.mulf %29, %29 : vector<128x128xf32>
      %cst_17 = arith.constant dense<0.000000e+00> : vector<128xf32>
      %31 = vector.multi_reduction <add>, %30, %cst_17 [1] : vector<128x128xf32> to vector<128xf32>
      %32 = vector.shape_cast %31 : vector<128xf32> to vector<128x1xf32>
      %cst_18 = arith.constant 3.125000e-02 : f32
      %33 = vector.broadcast %cst_18 : f32 to vector<128x1xf32>
      %34 = arith.mulf %32, %33 : vector<128x1xf32>
      %cst_19 = arith.constant 9.99999974E-6 : f32
      %35 = vector.broadcast %cst_19 : f32 to vector<128x1xf32>
      %36 = arith.addf %34, %35 : vector<128x1xf32>
      %37 = math.rsqrt %36 : vector<128x1xf32>
      %38 = vector.broadcast %37 : vector<128x1xf32> to vector<128x128xf32>
      %39 = arith.mulf %29, %38 : vector<128x128xf32>
      %c0_20 = arith.constant 0 : index
      %c0_21 = arith.constant 0 : index
      %40 = vector.load %arg3[%c0_20, %c0_21] : memref<1x128xf32, #tpu.memory_space<vmem>>, vector<1x128xf32>
      %41 = vector.broadcast %40 : vector<1x128xf32> to vector<128x128xf32>
      %42 = arith.mulf %39, %41 : vector<128x128xf32>
      %c0_22 = arith.constant 0 : index
      %c0_23 = arith.constant 0 : index
      %43 = vector.load %arg4[%c0_22, %c0_23] : memref<1x128xf32, #tpu.memory_space<vmem>>, vector<1x128xf32>
      %44 = vector.broadcast %43 : vector<1x128xf32> to vector<128x128xf32>
      %45 = arith.addf %42, %44 : vector<128x128xf32>
      %cst_24 = arith.constant 0.000000e+00 : f32
      %46 = vector.broadcast %cst_24 : f32 to vector<128x128xf32>
      %47 = arith.maximumf %45, %46 : vector<128x128xf32>
      %48 = arith.truncf %47 : vector<128x128xf32> to vector<128x128xbf16>
      %c0_25 = arith.constant 0 : index
      %c0_26 = arith.constant 0 : index
      %49 = vector.load %arg5[%c0_25, %c0_26] : memref<128x128xbf16, #tpu.memory_space<vmem>>, vector<128x128xbf16>
      %cst_27 = arith.constant dense<0.000000e+00> : vector<128x128xf32>
      %50 = tpu.matmul %48, %49, %cst_27 {dimension_numbers = #tpu.dot_dimension_numbers<[1], [0], [0], [1], [0, 0, 1, 1], [], []>} : vector<128x128xbf16>, vector<128x128xbf16>, vector<128x128xf32> -> vector<128x128xf32>
      %51 = arith.truncf %50 : vector<128x128xf32> to vector<128x128xbf16>
      %52 = arith.index_cast %18 : i32 to index
      %c0_28 = arith.constant 0 : index
      %53 = vector.load %arg9[%52, %c0_28] : memref<128x128xbf16, #tpu.memory_space<vmem>>, vector<128x128xbf16>
      tpu.vector_store %arg9[%52, %c0_28], %51 {strides = array<i32>} : memref<128x128xbf16, #tpu.memory_space<vmem>>, vector<128x128xbf16>,
      %c1_i32_29 = arith.constant 1 : i32
    } else {
    }
    %c128_i32 = arith.constant 128 : i32
    %3 = arith.muli %arg0, %c128_i32 : i32
    %4 = tpu.assume_multiple %3, 128 : i32
    %5 = arith.index_cast %4 : i32 to index
    %c0 = arith.constant 0 : index
    %6 = vector.load %arg2[%5, %c0] : memref<128x128xf32, #tpu.memory_space<vmem>>, vector<128x128xf32>
    %c0_1 = arith.constant 0 : index
    %c0_2 = arith.constant 0 : index
    %7 = vector.load %arg6[%c0_1, %c0_2] : memref<1x128xf32, #tpu.memory_space<vmem>>, vector<1x128xf32>
    %8 = vector.broadcast %7 : vector<1x128xf32> to vector<128x128xf32>
    %9 = arith.addf %6, %8 : vector<128x128xf32>
    %c0_3 = arith.constant 0 : index
    %c0_4 = arith.constant 0 : index
    %10 = vector.load %arg7[%c0_3, %c0_4] : memref<128x128xbf16, #tpu.memory_space<vmem>>, vector<128x128xbf16>
    %c0_5 = arith.constant 0 : index
    %c0_6 = arith.constant 0 : index
    %11 = vector.load %arg9[%c0_5, %c0_6] : memref<128x128xbf16, #tpu.memory_space<vmem>>, vector<128x128xbf16>
    %cst = arith.constant dense<0.000000e+00> : vector<128x128xf32>
    %12 = tpu.matmul %10, %11, %cst {dimension_numbers = #tpu.dot_dimension_numbers<[1], [0], [0], [1], [0, 0, 1, 1], [], []>} : vector<128x128xbf16>, vector<128x128xbf16>, vector<128x128xf32> -> vector<128x128xf32>
    %13 = arith.addf %9, %12 : vector<128x128xf32>
    %c0_7 = arith.constant 0 : index
    %c0_8 = arith.constant 0 : index
    %14 = vector.load %arg8[%c0_7, %c0_8] : memref<128x128xf32, #tpu.memory_space<vmem>>, vector<128x128xf32>
    tpu.vector_store %arg8[%c0_7, %c0_8], %13 {strides = array<i32>} : memref<128x128xf32, #tpu.memory_space<vmem>>, vector<128x128xf32>,
    return
  }
  func.func @transform_0(%arg0: i32) -> (i32, i32) {
    %c0_i32 = arith.constant 0 : i32
    %c0_i32_0 = arith.constant 0 : i32
    %c0_i32_1 = arith.constant 0 : i32
    return %c0_i32, %c0_i32_0 : i32, i32
  }
  func.func @transform_1(%arg0: i32) -> (i32, i32) {
    %c0_i32 = arith.constant 0 : i32
    %c0_i32_0 = arith.constant 0 : i32
    %c0_i32_1 = arith.constant 0 : i32
    return %c0_i32, %c0_i32_0 : i32, i32
  }
  func.func @transform_2(%arg0: i32) -> (i32, i32) {
    %c0_i32 = arith.constant 0 : i32
    %c0_i32_0 = arith.constant 0 : i32
    %c0_i32_1 = arith.constant 0 : i32
    return %c0_i32, %c0_i32_0 : i32, i32
  }
  func.func @transform_3(%arg0: i32) -> (i32, i32) {
    %c0_i32 = arith.constant 0 : i32
    %c0_i32_0 = arith.constant 0 : i32
    %c0_i32_1 = arith.constant 0 : i32
    return %c0_i32, %c0_i32_0 : i32, i32
  }
  func.func @transform_4(%arg0: i32) -> (i32, i32) {
    %c0_i32 = arith.constant 0 : i32
    %c0_i32_0 = arith.constant 0 : i32
    %c0_i32_1 = arith.constant 0 : i32
    return %c0_i32, %c0_i32_0 : i32, i32
  }
  func.func @transform_5(%arg0: i32) -> (i32, i32) {
    %c0_i32 = arith.constant 0 : i32
    %c0_i32_0 = arith.constant 0 : i32
    %c0_i32_1 = arith.constant 0 : i32
    return %c0_i32, %c0_i32_0 : i32, i32
  }
  func.func @transform_6(%arg0: i32) -> (i32, i32) {
    %c0_i32 = arith.constant 0 : i32
    %c0_i32_0 = arith.constant 0 : i32
    return %arg0, %c0_i32 : i32, i32
  }
  func.func @transform_7(%arg0: i32) -> (i32, i32) {
    %c0_i32 = arith.constant 0 : i32
    %c0_i32_0 = arith.constant 0 : i32
    return %arg0, %c0_i32 : i32, i32
  }
}

module attributes {stable_mosaic.version = 11 : i64} {
  func.func @kernel(%arg0: i32, %arg1: memref<1x128xf32, #tpu.memory_space<vmem>>, %arg2: memref<128x128xf32, #tpu.memory_space<vmem>>, %arg3: memref<1x128xf32, #tpu.memory_space<vmem>>, %arg4: memref<1x128xf32, #tpu.memory_space<vmem>>, %arg5: memref<128x128xbf16, #tpu.memory_space<vmem>>, %arg6: memref<1x128xf32, #tpu.memory_space<vmem>>, %arg7: memref<128x128xf32, #tpu.memory_space<vmem>>) attributes {dimension_semantics = [#tpu.dimension_semantics<parallel>], iteration_bounds = array<i64: 1>, scalar_prefetch = 0 : i64, scratch_operands = 0 : i64, tpu.core_type = #tpu.core_type<tc>, window_params = [{pipeline_mode = #tpu.pipeline_mode<synchronous>, transform_indices = @transform_0, window_bounds = array<i64: 1, 128>}, {transform_indices = @transform_1, window_bounds = array<i64: 128, 128>}, {pipeline_mode = #tpu.pipeline_mode<synchronous>, transform_indices = @transform_2, window_bounds = array<i64: 1, 128>}, {pipeline_mode = #tpu.pipeline_mode<synchronous>, transform_indices = @transform_3, window_bounds = array<i64: 1, 128>}, {pipeline_mode = #tpu.pipeline_mode<synchronous>, transform_indices = @transform_4, window_bounds = array<i64: 128, 128>}, {pipeline_mode = #tpu.pipeline_mode<synchronous>, transform_indices = @transform_5, window_bounds = array<i64: 1, 128>}, {transform_indices = @transform_6, window_bounds = array<i64: 128, 128>}]} {
    %c0 = arith.constant 0 : index
    %c0_0 = arith.constant 0 : index
    %0 = vector.load %arg2[%c0, %c0_0] : memref<128x128xf32, #tpu.memory_space<vmem>>, vector<128x128xf32>
    %cst = arith.constant dense<0.000000e+00> : vector<128xf32>
    %1 = vector.multi_reduction <add>, %0, %cst [1] : vector<128x128xf32> to vector<128xf32>
    %2 = vector.shape_cast %1 : vector<128xf32> to vector<128x1xf32>
    %cst_1 = arith.constant 3.125000e-02 : f32
    %3 = vector.broadcast %cst_1 : f32 to vector<128x1xf32>
    %4 = arith.mulf %2, %3 : vector<128x1xf32>
    %5 = vector.broadcast %4 : vector<128x1xf32> to vector<128x128xf32>
    %6 = arith.subf %0, %5 : vector<128x128xf32>
    %c0_2 = arith.constant 0 : index
    %c0_3 = arith.constant 0 : index
    %7 = vector.load %arg1[%c0_2, %c0_3] : memref<1x128xf32, #tpu.memory_space<vmem>>, vector<1x128xf32>
    %8 = vector.broadcast %7 : vector<1x128xf32> to vector<128x128xf32>
    %9 = arith.mulf %6, %8 : vector<128x128xf32>
    %10 = arith.mulf %9, %9 : vector<128x128xf32>
    %cst_4 = arith.constant dense<0.000000e+00> : vector<128xf32>
    %11 = vector.multi_reduction <add>, %10, %cst_4 [1] : vector<128x128xf32> to vector<128xf32>
    %12 = vector.shape_cast %11 : vector<128xf32> to vector<128x1xf32>
    %cst_5 = arith.constant 3.125000e-02 : f32
    %13 = vector.broadcast %cst_5 : f32 to vector<128x1xf32>
    %14 = arith.mulf %12, %13 : vector<128x1xf32>
    %cst_6 = arith.constant 9.99999974E-6 : f32
    %15 = vector.broadcast %cst_6 : f32 to vector<128x1xf32>
    %16 = arith.addf %14, %15 : vector<128x1xf32>
    %17 = math.rsqrt %16 : vector<128x1xf32>
    %18 = vector.broadcast %17 : vector<128x1xf32> to vector<128x128xf32>
    %19 = arith.mulf %9, %18 : vector<128x128xf32>
    %c0_7 = arith.constant 0 : index
    %c0_8 = arith.constant 0 : index
    %20 = vector.load %arg3[%c0_7, %c0_8] : memref<1x128xf32, #tpu.memory_space<vmem>>, vector<1x128xf32>
    %21 = vector.broadcast %20 : vector<1x128xf32> to vector<128x128xf32>
    %22 = arith.mulf %19, %21 : vector<128x128xf32>
    %c0_9 = arith.constant 0 : index
    %c0_10 = arith.constant 0 : index
    %23 = vector.load %arg4[%c0_9, %c0_10] : memref<1x128xf32, #tpu.memory_space<vmem>>, vector<1x128xf32>
    %24 = vector.broadcast %23 : vector<1x128xf32> to vector<128x128xf32>
    %25 = arith.addf %22, %24 : vector<128x128xf32>
    %cst_11 = arith.constant 0.000000e+00 : f32
    %26 = vector.broadcast %cst_11 : f32 to vector<128x128xf32>
    %27 = arith.maximumf %25, %26 : vector<128x128xf32>
    %28 = arith.truncf %27 : vector<128x128xf32> to vector<128x128xbf16>
    %c0_12 = arith.constant 0 : index
    %c0_13 = arith.constant 0 : index
    %29 = vector.load %arg5[%c0_12, %c0_13] : memref<128x128xbf16, #tpu.memory_space<vmem>>, vector<128x128xbf16>
    %cst_14 = arith.constant dense<0.000000e+00> : vector<128x128xf32>
    %30 = tpu.matmul %28, %29, %cst_14 {dimension_numbers = #tpu.dot_dimension_numbers<[1], [0], [0], [1], [0, 0, 1, 1], [], []>} : vector<128x128xbf16>, vector<128x128xbf16>, vector<128x128xf32> -> vector<128x128xf32>
    %c0_15 = arith.constant 0 : index
    %c0_16 = arith.constant 0 : index
    %31 = vector.load %arg6[%c0_15, %c0_16] : memref<1x128xf32, #tpu.memory_space<vmem>>, vector<1x128xf32>
    %32 = vector.broadcast %31 : vector<1x128xf32> to vector<128x128xf32>
    %33 = arith.addf %30, %32 : vector<128x128xf32>
    %c0_17 = arith.constant 0 : index
    %c0_18 = arith.constant 0 : index
    %34 = vector.load %arg7[%c0_17, %c0_18] : memref<128x128xf32, #tpu.memory_space<vmem>>, vector<128x128xf32>
    tpu.vector_store %arg7[%c0_17, %c0_18], %33 {strides = array<i32>} : memref<128x128xf32, #tpu.memory_space<vmem>>, vector<128x128xf32>,
    return
  }
  func.func @transform_0(%arg0: i32) -> (i32, i32) {
    %c0_i32 = arith.constant 0 : i32
    %c0_i32_0 = arith.constant 0 : i32
    %c0_i32_1 = arith.constant 0 : i32
    return %c0_i32, %c0_i32_0 : i32, i32
  }
  func.func @transform_1(%arg0: i32) -> (i32, i32) {
    %c0_i32 = arith.constant 0 : i32
    %c0_i32_0 = arith.constant 0 : i32
    return %arg0, %c0_i32 : i32, i32
  }
  func.func @transform_2(%arg0: i32) -> (i32, i32) {
    %c0_i32 = arith.constant 0 : i32
    %c0_i32_0 = arith.constant 0 : i32
    %c0_i32_1 = arith.constant 0 : i32
    return %c0_i32, %c0_i32_0 : i32, i32
  }
  func.func @transform_3(%arg0: i32) -> (i32, i32) {
    %c0_i32 = arith.constant 0 : i32
    %c0_i32_0 = arith.constant 0 : i32
    %c0_i32_1 = arith.constant 0 : i32
    return %c0_i32, %c0_i32_0 : i32, i32
  }
  func.func @transform_4(%arg0: i32) -> (i32, i32) {
    %c0_i32 = arith.constant 0 : i32
    %c0_i32_0 = arith.constant 0 : i32
    %c0_i32_1 = arith.constant 0 : i32
    return %c0_i32, %c0_i32_0 : i32, i32
  }
  func.func @transform_5(%arg0: i32) -> (i32, i32) {
    %c0_i32 = arith.constant 0 : i32
    %c0_i32_0 = arith.constant 0 : i32
    %c0_i32_1 = arith.constant 0 : i32
    return %c0_i32, %c0_i32_0 : i32, i32
  }
  func.func @transform_6(%arg0: i32) -> (i32, i32) {
    %c0_i32 = arith.constant 0 : i32
    %c0_i32_0 = arith.constant 0 : i32
    return %arg0, %c0_i32 : i32, i32
  }
}

</mosaic_0001>

<llo_original>
// kernel: deepgcn_forward.6
$region0: #{deepgcn_forward.6}
  #allocation0 [shape = 'u32[]', space=smem, size = 0x4, offset = 0x4, fixed_abs, tag = 'smem constant byte address 0x4 - core index']
  #allocation1 [shape = 'u32[72,128]{1,0:T(1,128)}', space=vmem, size = 0x9000, scoped, tag = 'internal scratch']
  %s0 = inlined_call_operand.vmem [shape: bf16[128,128], index: 0, kind: input, shape index: {}]
  %s1 = inlined_call_operand.vmem [shape: bf16[128,128], index: 1, kind: input, shape index: {}]
  %s2 = inlined_call_operand.vmem [shape: f32[1,128], index: 2, kind: input, shape index: {}]
  %s3 = inlined_call_operand.vmem [shape: f32[128,128], index: 3, kind: output, shape index: {}]
  %s4 = sld [smem:[#allocation0]]
  $region30: #{deepgcn_forward.6} parent=0
    _
  %s6 = ssub.s32 1, %s4
  %s7 = scalar_select 0, %s6, %s4
  // Predicated region
  $region2: #{deepgcn_forward.6} parent=0 // pred_check
    _
  $region3: #{deepgcn_forward.6} parent=0 // pred_check_branch
    %9 = sbr.rel (0) target = $region5
  $region4: #{deepgcn_forward.6} parent=0 // pred_region
    _
  $region5: #{deepgcn_forward.6} parent=0 // pred_fallthru
    _
  // Predicated region
  $region6: #{deepgcn_forward.6} parent=0 // pred_check
    _
  $region7: #{deepgcn_forward.6} parent=0 // pred_check_branch
    %11 = sbr.rel (0) target = $region9
  $region8: #{deepgcn_forward.6} parent=0 // pred_region
    _
  $region9: #{deepgcn_forward.6} parent=0 // pred_fallthru
    _
  // Predicated region
  $region10: #{deepgcn_forward.6} parent=0 // pred_check
    _
  $region11: #{deepgcn_forward.6} parent=0 // pred_check_branch
    %13 = sbr.rel (0) target = $region13
  $region12: #{deepgcn_forward.6} parent=0 // pred_region
    _
  $region13: #{deepgcn_forward.6} parent=0 // pred_fallthru
    _
  %p14 = scmp.eq.s32.totalorder 0, 0
  // Predicated region
  $region14: #{deepgcn_forward.6} parent=0 // pred_check
    %p15 = pneg %p14
  $region15: #{deepgcn_forward.6} parent=0 // pred_check_branch
    %17 = sbr.rel (%p15) target = $region17
  $region16: #{deepgcn_forward.6} parent=0 // pred_region
    %18 = vst [vmem:[%s3] sm:$0xff] 0.0
    %19 = vst [vmem:[%s3 + $0x8] sm:$0xff] 0.0
    %20 = vst [vmem:[%s3 + $0x10] sm:$0xff] 0.0
    %21 = vst [vmem:[%s3 + $0x18] sm:$0xff] 0.0
    %22 = vst [vmem:[%s3 + $0x20] sm:$0xff] 0.0
    %23 = vst [vmem:[%s3 + $0x28] sm:$0xff] 0.0
    %24 = vst [vmem:[%s3 + $0x30] sm:$0xff] 0.0
    %25 = vst [vmem:[%s3 + $0x38] sm:$0xff] 0.0
    %26 = vst [vmem:[%s3 + $0x40] sm:$0xff] 0.0
    %27 = vst [vmem:[%s3 + $0x48] sm:$0xff] 0.0
    %28 = vst [vmem:[%s3 + $0x50] sm:$0xff] 0.0
    %29 = vst [vmem:[%s3 + $0x58] sm:$0xff] 0.0
    %30 = vst [vmem:[%s3 + $0x60] sm:$0xff] 0.0
    %31 = vst [vmem:[%s3 + $0x68] sm:$0xff] 0.0
    %32 = vst [vmem:[%s3 + $0x70] sm:$0xff] 0.0
    %33 = vst [vmem:[%s3 + $0x78] sm:$0xff] 0.0
  $region17: #{deepgcn_forward.6} parent=0 // pred_fallthru
    _
  %s34 = smul.u32 0, 128
  %s35 = sshra.s32 %s34, 3
  %s36 = sand.u32 %s34, 7
  %s37 = smul.addr %s35, 4
  %s38 = scalar_lea.vmem %s1, %s37
  %v39 = vld [vmem:[%s38] sm:$0xf]
  %v40 = vld [vmem:[%s38 + $0x4] sm:$0xf]
  %v41 = vld [vmem:[%s38 + $0x8] sm:$0xf]
  %v42 = vld [vmem:[%s38 + $0xc] sm:$0xf]
  %v43 = vld [vmem:[%s38 + $0x10] sm:$0xf]
  %v44 = vld [vmem:[%s38 + $0x14] sm:$0xf]
  %v45 = vld [vmem:[%s38 + $0x18] sm:$0xf]
  %v46 = vld [vmem:[%s38 + $0x1c] sm:$0xf]
  %v47 = vld [vmem:[%s38 + $0x20] sm:$0xf]
  %v48 = vld [vmem:[%s38 + $0x24] sm:$0xf]
  %v49 = vld [vmem:[%s38 + $0x28] sm:$0xf]
  %v50 = vld [vmem:[%s38 + $0x2c] sm:$0xf]
  %v51 = vld [vmem:[%s38 + $0x30] sm:$0xf]
  %v52 = vld [vmem:[%s38 + $0x34] sm:$0xf]
  %v53 = vld [vmem:[%s38 + $0x38] sm:$0xf]
  %v54 = vld [vmem:[%s38 + $0x3c] sm:$0xf]
  %v55 = vld [vmem:[%s3] sm:$0xff]
  %v56 = vld [vmem:[%s3 + $0x8] sm:$0xff]
  %v57 = vld [vmem:[%s3 + $0x10] sm:$0xff]
  %v58 = vld [vmem:[%s3 + $0x18] sm:$0xff]
  %v59 = vld [vmem:[%s3 + $0x20] sm:$0xff]
  %v60 = vld [vmem:[%s3 + $0x28] sm:$0xff]
  %v61 = vld [vmem:[%s3 + $0x30] sm:$0xff]
  %v62 = vld [vmem:[%s3 + $0x38] sm:$0xff]
  %v63 = vld [vmem:[%s3 + $0x40] sm:$0xff]
  %v64 = vld [vmem:[%s3 + $0x48] sm:$0xff]
  %v65 = vld [vmem:[%s3 + $0x50] sm:$0xff]
  %v66 = vld [vmem:[%s3 + $0x58] sm:$0xff]
  %v67 = vld [vmem:[%s3 + $0x60] sm:$0xff]
  %v68 = vld [vmem:[%s3 + $0x68] sm:$0xff]
  %v69 = vld [vmem:[%s3 + $0x70] sm:$0xff]
  %v70 = vld [vmem:[%s3 + $0x78] sm:$0xff]
  %v71 = vld [vmem:[%s0] sm:$0xf]
  %v72 = vld [vmem:[%s0 + $0x4] sm:$0xf]
  %v73 = vld [vmem:[%s0 + $0x8] sm:$0xf]
  %v74 = vld [vmem:[%s0 + $0xc] sm:$0xf]
  %v75 = vld [vmem:[%s0 + $0x10] sm:$0xf]
  %v76 = vld [vmem:[%s0 + $0x14] sm:$0xf]
  %v77 = vld [vmem:[%s0 + $0x18] sm:$0xf]
  %v78 = vld [vmem:[%s0 + $0x1c] sm:$0xf]
  %v79 = vld [vmem:[%s0 + $0x20] sm:$0xf]
  %v80 = vld [vmem:[%s0 + $0x24] sm:$0xf]
  %v81 = vld [vmem:[%s0 + $0x28] sm:$0xf]
  %v82 = vld [vmem:[%s0 + $0x2c] sm:$0xf]
  %v83 = vld [vmem:[%s0 + $0x30] sm:$0xf]
  %v84 = vld [vmem:[%s0 + $0x34] sm:$0xf]
  %v85 = vld [vmem:[%s0 + $0x38] sm:$0xf]
  %v86 = vld [vmem:[%s0 + $0x3c] sm:$0xf]
  %v103 = vunpack.c.l.b16 %v71
  %v104 = vunpack.c.l.b16 %v72
  %v105 = vunpack.c.l.b16 %v73
  %v106 = vunpack.c.l.b16 %v74
  %v107 = vunpack.c.l.b16 %v75
  %v108 = vunpack.c.l.b16 %v76
  %v109 = vunpack.c.l.b16 %v77
  %v110 = vunpack.c.l.b16 %v78
  %v111 = vunpack.c.l.b16 %v79
  %v112 = vunpack.c.l.b16 %v80
  %v113 = vunpack.c.l.b16 %v81
  %v114 = vunpack.c.l.b16 %v82
  %v115 = vunpack.c.l.b16 %v83
  %v116 = vunpack.c.l.b16 %v84
  %v117 = vunpack.c.l.b16 %v85
  %v118 = vunpack.c.l.b16 %v86
  %v119 = vpack.c.b16 %v104, %v103
  %v120 = vpack.c.b16 %v106, %v105
  %v121 = vpack.c.b16 %v108, %v107
  %v122 = vpack.c.b16 %v110, %v109
  %v123 = vpack.c.b16 %v112, %v111
  %v124 = vpack.c.b16 %v114, %v113
  %v125 = vpack.c.b16 %v116, %v115
  %v126 = vpack.c.b16 %v118, %v117
  %v151 = vunpack.c.l.b16 %v39
  %v152 = vunpack.c.l.b16 %v40
  %v153 = vunpack.c.l.b16 %v41
  %v154 = vunpack.c.l.b16 %v42
  %v155 = vunpack.c.l.b16 %v43
  %v156 = vunpack.c.l.b16 %v44
  %v157 = vunpack.c.l.b16 %v45
  %v158 = vunpack.c.l.b16 %v46
  %v159 = vunpack.c.l.b16 %v47
  %v160 = vunpack.c.l.b16 %v48
  %v161 = vunpack.c.l.b16 %v49
  %v162 = vunpack.c.l.b16 %v50
  %v163 = vunpack.c.l.b16 %v51
  %v164 = vunpack.c.l.b16 %v52
  %v165 = vunpack.c.l.b16 %v53
  %v166 = vunpack.c.l.b16 %v54
  %v167 = vpack.c.b16 %v152, %v151
  %v168 = vpack.c.b16 %v154, %v153
  %v169 = vpack.c.b16 %v156, %v155
  %v170 = vpack.c.b16 %v158, %v157
  %v171 = vpack.c.b16 %v160, %v159
  %v172 = vpack.c.b16 %v162, %v161
  %v173 = vpack.c.b16 %v164, %v163
  %v174 = vpack.c.b16 %v166, %v165
  %183 = vmatpush.bf16.msra.mxu0 %v174
  %184 = vmatpush.bf16.msra.mxu0 %v173
  %185 = vmatpush.bf16.msra.mxu0 %v172
  %186 = vmatpush.bf16.msra.mxu0 %v171
  %187 = vmatpush.bf16.msra.mxu0 %v170
  %188 = vmatpush.bf16.msra.mxu0 %v169
  %189 = vmatpush.bf16.msra.mxu0 %v168
  %190 = vmatpush.bf16.msra.mxu0 %v167
  %191 = vmatmul.bf16.gmra.mxu0 %v119
  %v192 = vpop.f32.mrf.mxu0
  %v193 = vadd.f32 0.0, %v192
  %v194 = vpop.f32.mrf.mxu0
  %v195 = vadd.f32 0.0, %v194
  %196 = vmatmul.bf16.gmra.mxu0 %v120
  %v197 = vpop.f32.mrf.mxu0
  %v198 = vadd.f32 0.0, %v197
  %v199 = vpop.f32.mrf.mxu0
  %v200 = vadd.f32 0.0, %v199
  %201 = vmatmul.bf16.gmra.mxu0 %v121
  %v202 = vpop.f32.mrf.mxu0
  %v203 = vadd.f32 0.0, %v202
  %v204 = vpop.f32.mrf.mxu0
  %v205 = vadd.f32 0.0, %v204
  %206 = vmatmul.bf16.gmra.mxu0 %v122
  %v207 = vpop.f32.mrf.mxu0
  %v208 = vadd.f32 0.0, %v207
  %v209 = vpop.f32.mrf.mxu0
  %v210 = vadd.f32 0.0, %v209
  %211 = vmatmul.bf16.gmra.mxu0 %v123
  %v212 = vpop.f32.mrf.mxu0
  %v213 = vadd.f32 0.0, %v212
  %v214 = vpop.f32.mrf.mxu0
  %v215 = vadd.f32 0.0, %v214
  %216 = vmatmul.bf16.gmra.mxu0 %v124
  %v217 = vpop.f32.mrf.mxu0
  %v218 = vadd.f32 0.0, %v217
  %v219 = vpop.f32.mrf.mxu0
  %v220 = vadd.f32 0.0, %v219
  %221 = vmatmul.bf16.gmra.mxu0 %v125
  %v222 = vpop.f32.mrf.mxu0
  %v223 = vadd.f32 0.0, %v222
  %v224 = vpop.f32.mrf.mxu0
  %v225 = vadd.f32 0.0, %v224
  %226 = vmatmul.bf16.gmra.mxu0 %v126
  %v227 = vpop.f32.mrf.mxu0
  %v228 = vadd.f32 0.0, %v227
  %v229 = vpop.f32.mrf.mxu0
  %v230 = vadd.f32 0.0, %v229
  %231 = vdwg.mxu0
  %v232 = vadd.f32 %v55, %v193
  %v233 = vadd.f32 %v56, %v195
  %v234 = vadd.f32 %v57, %v198
  %v235 = vadd.f32 %v58, %v200
  %v236 = vadd.f32 %v59, %v203
  %v237 = vadd.f32 %v60, %v205
  %v238 = vadd.f32 %v61, %v208
  %v239 = vadd.f32 %v62, %v210
  %v240 = vadd.f32 %v63, %v213
  %v241 = vadd.f32 %v64, %v215
  %v242 = vadd.f32 %v65, %v218
  %v243 = vadd.f32 %v66, %v220
  %v244 = vadd.f32 %v67, %v223
  %v245 = vadd.f32 %v68, %v225
  %v246 = vadd.f32 %v69, %v228
  %v247 = vadd.f32 %v70, %v230
  %248 = vst [vmem:[%s3] sm:$0xff] %v232
  %249 = vst [vmem:[%s3 + $0x8] sm:$0xff] %v233
  %250 = vst [vmem:[%s3 + $0x10] sm:$0xff] %v234
  %251 = vst [vmem:[%s3 + $0x18] sm:$0xff] %v235
  %252 = vst [vmem:[%s3 + $0x20] sm:$0xff] %v236
  %253 = vst [vmem:[%s3 + $0x28] sm:$0xff] %v237
  %254 = vst [vmem:[%s3 + $0x30] sm:$0xff] %v238
  %255 = vst [vmem:[%s3 + $0x38] sm:$0xff] %v239
  %256 = vst [vmem:[%s3 + $0x40] sm:$0xff] %v240
  %257 = vst [vmem:[%s3 + $0x48] sm:$0xff] %v241
  %258 = vst [vmem:[%s3 + $0x50] sm:$0xff] %v242
  %259 = vst [vmem:[%s3 + $0x58] sm:$0xff] %v243
  %260 = vst [vmem:[%s3 + $0x60] sm:$0xff] %v244
  %261 = vst [vmem:[%s3 + $0x68] sm:$0xff] %v245
  %262 = vst [vmem:[%s3 + $0x70] sm:$0xff] %v246
  %263 = vst [vmem:[%s3 + $0x78] sm:$0xff] %v247
  // Predicated region
  $region18: #{deepgcn_forward.6} parent=0 // pred_check
    %p264 = pneg %p14
  $region19: #{deepgcn_forward.6} parent=0 // pred_check_branch
    %266 = sbr.rel (%p264) target = $region21
  $region20: #{deepgcn_forward.6} parent=0 // pred_region
    %v267 = vld [vmem:[%s3] sm:$0xff]
    %v268 = vld [vmem:[%s3 + $0x8] sm:$0xff]
    %v269 = vld [vmem:[%s3 + $0x10] sm:$0xff]
    %v270 = vld [vmem:[%s3 + $0x18] sm:$0xff]
    %v271 = vld [vmem:[%s3 + $0x20] sm:$0xff]
    %v272 = vld [vmem:[%s3 + $0x28] sm:$0xff]
    %v273 = vld [vmem:[%s3 + $0x30] sm:$0xff]
    %v274 = vld [vmem:[%s3 + $0x38] sm:$0xff]
    %v275 = vld [vmem:[%s3 + $0x40] sm:$0xff]
    %v276 = vld [vmem:[%s3 + $0x48] sm:$0xff]
    %v277 = vld [vmem:[%s3 + $0x50] sm:$0xff]
    %v278 = vld [vmem:[%s3 + $0x58] sm:$0xff]
    %v279 = vld [vmem:[%s3 + $0x60] sm:$0xff]
    %v280 = vld [vmem:[%s3 + $0x68] sm:$0xff]
    %v281 = vld [vmem:[%s3 + $0x70] sm:$0xff]
    %v282 = vld [vmem:[%s3 + $0x78] sm:$0xff]
    %v283 = vld [vmem:[%s2] sm:$0x1]
    %v285 = vperm.slane %v283, 0
    %v287 = vadd.f32 %v267, %v285
    %v288 = vadd.f32 %v268, %v285
    %v289 = vadd.f32 %v269, %v285
    %v290 = vadd.f32 %v270, %v285
    %v291 = vadd.f32 %v271, %v285
    %v292 = vadd.f32 %v272, %v285
    %v293 = vadd.f32 %v273, %v285
    %v294 = vadd.f32 %v274, %v285
    %v295 = vadd.f32 %v275, %v285
    %v296 = vadd.f32 %v276, %v285
    %v297 = vadd.f32 %v277, %v285
    %v298 = vadd.f32 %v278, %v285
    %v299 = vadd.f32 %v279, %v285
    %v300 = vadd.f32 %v280, %v285
    %v301 = vadd.f32 %v281, %v285
    %v302 = vadd.f32 %v282, %v285
    %303 = vst [vmem:[%s3] sm:$0xff] %v287
    %304 = vst [vmem:[%s3 + $0x8] sm:$0xff] %v288
    %305 = vst [vmem:[%s3 + $0x10] sm:$0xff] %v289
    %306 = vst [vmem:[%s3 + $0x18] sm:$0xff] %v290
    %307 = vst [vmem:[%s3 + $0x20] sm:$0xff] %v291
    %308 = vst [vmem:[%s3 + $0x28] sm:$0xff] %v292
    %309 = vst [vmem:[%s3 + $0x30] sm:$0xff] %v293
    %310 = vst [vmem:[%s3 + $0x38] sm:$0xff] %v294
    %311 = vst [vmem:[%s3 + $0x40] sm:$0xff] %v295
    %312 = vst [vmem:[%s3 + $0x48] sm:$0xff] %v296
    %313 = vst [vmem:[%s3 + $0x50] sm:$0xff] %v297
    %314 = vst [vmem:[%s3 + $0x58] sm:$0xff] %v298
    %315 = vst [vmem:[%s3 + $0x60] sm:$0xff] %v299
    %316 = vst [vmem:[%s3 + $0x68] sm:$0xff] %v300
    %317 = vst [vmem:[%s3 + $0x70] sm:$0xff] %v301
    %318 = vst [vmem:[%s3 + $0x78] sm:$0xff] %v302
  $region21: #{deepgcn_forward.6} parent=0 // pred_fallthru
    _
  // Predicated region
  $region22: #{deepgcn_forward.6} parent=0 // pred_check
    _
  $region23: #{deepgcn_forward.6} parent=0 // pred_check_branch
    %320 = sbr.rel (0) target = $region25
  $region24: #{deepgcn_forward.6} parent=0 // pred_region
    _
  $region25: #{deepgcn_forward.6} parent=0 // pred_fallthru
    _
  // Predicated region
  $region26: #{deepgcn_forward.6} parent=0 // pred_check
    _
  $region27: #{deepgcn_forward.6} parent=0 // pred_check_branch
    %322 = sbr.rel (0) target = $region29
  $region28: #{deepgcn_forward.6} parent=0 // pred_region
    _
  $region29: #{deepgcn_forward.6} parent=0 // pred_fallthru
    _

// kernel: deepgcn_forward.5
$region0: #{deepgcn_forward.5}
  #allocation0 [shape = 'u32[]', space=smem, size = 0x4, offset = 0x4, fixed_abs, tag = 'smem constant byte address 0x4 - core index']
  #allocation1 [shape = 'u32[72,128]{1,0:T(1,128)}', space=vmem, size = 0x9000, scoped, tag = 'internal scratch']
  #allocation2 [shape = 'f32[128,128]{1,0:T(8,128)}', space=vmem, size = 0x10000, scoped, tag = 'scratch operand']
  %s0 = inlined_call_operand.vmem [shape: bf16[128,128], index: 0, kind: input, shape index: {}]
  %s1 = inlined_call_operand.vmem [shape: bf16[128,128], index: 1, kind: input, shape index: {}]
  %s2 = inlined_call_operand.vmem [shape: f32[1,128], index: 2, kind: input, shape index: {}]
  %s3 = inlined_call_operand.vmem [shape: bf16[128,128], index: 3, kind: input, shape index: {}]
  %s4 = inlined_call_operand.vmem [shape: bf16[128,128], index: 4, kind: output, shape index: {}]
  %s5 = sld [smem:[#allocation0]]
  $region34: #{deepgcn_forward.5} parent=0
    _
  %s7 = ssub.s32 1, %s5
  %s8 = scalar_select 0, %s7, %s5
  // Predicated region
  $region2: #{deepgcn_forward.5} parent=0 // pred_check
    _
  $region3: #{deepgcn_forward.5} parent=0 // pred_check_branch
    %10 = sbr.rel (0) target = $region5
  $region4: #{deepgcn_forward.5} parent=0 // pred_region
    _
  $region5: #{deepgcn_forward.5} parent=0 // pred_fallthru
    _
  // Predicated region
  $region6: #{deepgcn_forward.5} parent=0 // pred_check
    _
  $region7: #{deepgcn_forward.5} parent=0 // pred_check_branch
    %12 = sbr.rel (0) target = $region9
  $region8: #{deepgcn_forward.5} parent=0 // pred_region
    _
  $region9: #{deepgcn_forward.5} parent=0 // pred_fallthru
    _
  // Predicated region
  $region10: #{deepgcn_forward.5} parent=0 // pred_check
    _
  $region11: #{deepgcn_forward.5} parent=0 // pred_check_branch
    %14 = sbr.rel (0) target = $region13
  $region12: #{deepgcn_forward.5} parent=0 // pred_region
    _
  $region13: #{deepgcn_forward.5} parent=0 // pred_fallthru
    _
  // Predicated region
  $region14: #{deepgcn_forward.5} parent=0 // pred_check
    _
  $region15: #{deepgcn_forward.5} parent=0 // pred_check_branch
    %16 = sbr.rel (0) target = $region17
  $region16: #{deepgcn_forward.5} parent=0 // pred_region
    _
  $region17: #{deepgcn_forward.5} parent=0 // pred_fallthru
    _
  %p17 = scmp.eq.s32.totalorder 0, 0
  // Predicated region
  $region18: #{deepgcn_forward.5} parent=0 // pred_check
    %p18 = pneg %p17
  $region19: #{deepgcn_forward.5} parent=0 // pred_check_branch
    %20 = sbr.rel (%p18) target = $region21
  $region20: #{deepgcn_forward.5} parent=0 // pred_region
    %21 = vst [vmem:[#allocation2] sm:$0xff] 0.0
    %22 = vst [vmem:[#allocation2 + $0x8] sm:$0xff] 0.0
    %23 = vst [vmem:[#allocation2 + $0x10] sm:$0xff] 0.0
    %24 = vst [vmem:[#allocation2 + $0x18] sm:$0xff] 0.0
    %25 = vst [vmem:[#allocation2 + $0x20] sm:$0xff] 0.0
    %26 = vst [vmem:[#allocation2 + $0x28] sm:$0xff] 0.0
    %27 = vst [vmem:[#allocation2 + $0x30] sm:$0xff] 0.0
    %28 = vst [vmem:[#allocation2 + $0x38] sm:$0xff] 0.0
    %29 = vst [vmem:[#allocation2 + $0x40] sm:$0xff] 0.0
    %30 = vst [vmem:[#allocation2 + $0x48] sm:$0xff] 0.0
    %31 = vst [vmem:[#allocation2 + $0x50] sm:$0xff] 0.0
    %32 = vst [vmem:[#allocation2 + $0x58] sm:$0xff] 0.0
    %33 = vst [vmem:[#allocation2 + $0x60] sm:$0xff] 0.0
    %34 = vst [vmem:[#allocation2 + $0x68] sm:$0xff] 0.0
    %35 = vst [vmem:[#allocation2 + $0x70] sm:$0xff] 0.0
    %36 = vst [vmem:[#allocation2 + $0x78] sm:$0xff] 0.0
  $region21: #{deepgcn_forward.5} parent=0 // pred_fallthru
    _
  %v37 = vld [vmem:[#allocation2] sm:$0xff]
  %v38 = vld [vmem:[#allocation2 + $0x8] sm:$0xff]
  %v39 = vld [vmem:[#allocation2 + $0x10] sm:$0xff]
  %v40 = vld [vmem:[#allocation2 + $0x18] sm:$0xff]
  %v41 = vld [vmem:[#allocation2 + $0x20] sm:$0xff]
  %v42 = vld [vmem:[#allocation2 + $0x28] sm:$0xff]
  %v43 = vld [vmem:[#allocation2 + $0x30] sm:$0xff]
  %v44 = vld [vmem:[#allocation2 + $0x38] sm:$0xff]
  %v45 = vld [vmem:[#allocation2 + $0x40] sm:$0xff]
  %v46 = vld [vmem:[#allocation2 + $0x48] sm:$0xff]
  %v47 = vld [vmem:[#allocation2 + $0x50] sm:$0xff]
  %v48 = vld [vmem:[#allocation2 + $0x58] sm:$0xff]
  %v49 = vld [vmem:[#allocation2 + $0x60] sm:$0xff]
  %v50 = vld [vmem:[#allocation2 + $0x68] sm:$0xff]
  %v51 = vld [vmem:[#allocation2 + $0x70] sm:$0xff]
  %v52 = vld [vmem:[#allocation2 + $0x78] sm:$0xff]
  %v53 = vld [vmem:[%s0] sm:$0xf]
  %v54 = vld [vmem:[%s0 + $0x4] sm:$0xf]
  %v55 = vld [vmem:[%s0 + $0x8] sm:$0xf]
  %v56 = vld [vmem:[%s0 + $0xc] sm:$0xf]
  %v57 = vld [vmem:[%s0 + $0x10] sm:$0xf]
  %v58 = vld [vmem:[%s0 + $0x14] sm:$0xf]
  %v59 = vld [vmem:[%s0 + $0x18] sm:$0xf]
  %v60 = vld [vmem:[%s0 + $0x1c] sm:$0xf]
  %v61 = vld [vmem:[%s0 + $0x20] sm:$0xf]
  %v62 = vld [vmem:[%s0 + $0x24] sm:$0xf]
  %v63 = vld [vmem:[%s0 + $0x28] sm:$0xf]
  %v64 = vld [vmem:[%s0 + $0x2c] sm:$0xf]
  %v65 = vld [vmem:[%s0 + $0x30] sm:$0xf]
  %v66 = vld [vmem:[%s0 + $0x34] sm:$0xf]
  %v67 = vld [vmem:[%s0 + $0x38] sm:$0xf]
  %v68 = vld [vmem:[%s0 + $0x3c] sm:$0xf]
  %v69 = vld [vmem:[%s1] sm:$0xf]
  %v70 = vld [vmem:[%s1 + $0x4] sm:$0xf]
  %v71 = vld [vmem:[%s1 + $0x8] sm:$0xf]
  %v72 = vld [vmem:[%s1 + $0xc] sm:$0xf]
  %v73 = vld [vmem:[%s1 + $0x10] sm:$0xf]
  %v74 = vld [vmem:[%s1 + $0x14] sm:$0xf]
  %v75 = vld [vmem:[%s1 + $0x18] sm:$0xf]
  %v76 = vld [vmem:[%s1 + $0x1c] sm:$0xf]
  %v77 = vld [vmem:[%s1 + $0x20] sm:$0xf]
  %v78 = vld [vmem:[%s1 + $0x24] sm:$0xf]
  %v79 = vld [vmem:[%s1 + $0x28] sm:$0xf]
  %v80 = vld [vmem:[%s1 + $0x2c] sm:$0xf]
  %v81 = vld [vmem:[%s1 + $0x30] sm:$0xf]
  %v82 = vld [vmem:[%s1 + $0x34] sm:$0xf]
  %v83 = vld [vmem:[%s1 + $0x38] sm:$0xf]
  %v84 = vld [vmem:[%s1 + $0x3c] sm:$0xf]
  %v101 = vunpack.c.l.b16 %v53
  %v102 = vunpack.c.l.b16 %v54
  %v103 = vunpack.c.l.b16 %v55
  %v104 = vunpack.c.l.b16 %v56
  %v105 = vunpack.c.l.b16 %v57
  %v106 = vunpack.c.l.b16 %v58
  %v107 = vunpack.c.l.b16 %v59
  %v108 = vunpack.c.l.b16 %v60
  %v109 = vunpack.c.l.b16 %v61
  %v110 = vunpack.c.l.b16 %v62
  %v111 = vunpack.c.l.b16 %v63
  %v112 = vunpack.c.l.b16 %v64
  %v113 = vunpack.c.l.b16 %v65
  %v114 = vunpack.c.l.b16 %v66
  %v115 = vunpack.c.l.b16 %v67
  %v116 = vunpack.c.l.b16 %v68
  %v117 = vpack.c.b16 %v102, %v101
  %v118 = vpack.c.b16 %v104, %v103
  %v119 = vpack.c.b16 %v106, %v105
  %v120 = vpack.c.b16 %v108, %v107
  %v121 = vpack.c.b16 %v110, %v109
  %v122 = vpack.c.b16 %v112, %v111
  %v123 = vpack.c.b16 %v114, %v113
  %v124 = vpack.c.b16 %v116, %v115
  %v149 = vunpack.c.l.b16 %v69
  %v150 = vunpack.c.l.b16 %v70
  %v151 = vunpack.c.l.b16 %v71
  %v152 = vunpack.c.l.b16 %v72
  %v153 = vunpack.c.l.b16 %v73
  %v154 = vunpack.c.l.b16 %v74
  %v155 = vunpack.c.l.b16 %v75
  %v156 = vunpack.c.l.b16 %v76
  %v157 = vunpack.c.l.b16 %v77
  %v158 = vunpack.c.l.b16 %v78
  %v159 = vunpack.c.l.b16 %v79
  %v160 = vunpack.c.l.b16 %v80
  %v161 = vunpack.c.l.b16 %v81
  %v162 = vunpack.c.l.b16 %v82
  %v163 = vunpack.c.l.b16 %v83
  %v164 = vunpack.c.l.b16 %v84
  %v165 = vpack.c.b16 %v150, %v149
  %v166 = vpack.c.b16 %v152, %v151
  %v167 = vpack.c.b16 %v154, %v153
  %v168 = vpack.c.b16 %v156, %v155
  %v169 = vpack.c.b16 %v158, %v157
  %v170 = vpack.c.b16 %v160, %v159
  %v171 = vpack.c.b16 %v162, %v161
  %v172 = vpack.c.b16 %v164, %v163
  %181 = vmatpush.bf16.msra.mxu0 %v172
  %182 = vmatpush.bf16.msra.mxu0 %v171
  %183 = vmatpush.bf16.msra.mxu0 %v170
  %184 = vmatpush.bf16.msra.mxu0 %v169
  %185 = vmatpush.bf16.msra.mxu0 %v168
  %186 = vmatpush.bf16.msra.mxu0 %v167
  %187 = vmatpush.bf16.msra.mxu0 %v166
  %188 = vmatpush.bf16.msra.mxu0 %v165
  %189 = vmatmul.bf16.gmra.mxu0 %v117
  %v190 = vpop.f32.mrf.mxu0
  %v191 = vadd.f32 0.0, %v190
  %v192 = vpop.f32.mrf.mxu0
  %v193 = vadd.f32 0.0, %v192
  %194 = vmatmul.bf16.gmra.mxu0 %v118
  %v195 = vpop.f32.mrf.mxu0
  %v196 = vadd.f32 0.0, %v195
  %v197 = vpop.f32.mrf.mxu0
  %v198 = vadd.f32 0.0, %v197
  %199 = vmatmul.bf16.gmra.mxu0 %v119
  %v200 = vpop.f32.mrf.mxu0
  %v201 = vadd.f32 0.0, %v200
  %v202 = vpop.f32.mrf.mxu0
  %v203 = vadd.f32 0.0, %v202
  %204 = vmatmul.bf16.gmra.mxu0 %v120
  %v205 = vpop.f32.mrf.mxu0
  %v206 = vadd.f32 0.0, %v205
  %v207 = vpop.f32.mrf.mxu0
  %v208 = vadd.f32 0.0, %v207
  %209 = vmatmul.bf16.gmra.mxu0 %v121
  %v210 = vpop.f32.mrf.mxu0
  %v211 = vadd.f32 0.0, %v210
  %v212 = vpop.f32.mrf.mxu0
  %v213 = vadd.f32 0.0, %v212
  %214 = vmatmul.bf16.gmra.mxu0 %v122
  %v215 = vpop.f32.mrf.mxu0
  %v216 = vadd.f32 0.0, %v215
  %v217 = vpop.f32.mrf.mxu0
  %v218 = vadd.f32 0.0, %v217
  %219 = vmatmul.bf16.gmra.mxu0 %v123
  %v220 = vpop.f32.mrf.mxu0
  %v221 = vadd.f32 0.0, %v220
  %v222 = vpop.f32.mrf.mxu0
  %v223 = vadd.f32 0.0, %v222
  %224 = vmatmul.bf16.gmra.mxu0 %v124
  %v225 = vpop.f32.mrf.mxu0
  %v226 = vadd.f32 0.0, %v225
  %v227 = vpop.f32.mrf.mxu0
  %v228 = vadd.f32 0.0, %v227
  %229 = vdwg.mxu0
  %v230 = vadd.f32 %v37, %v191
  %v231 = vadd.f32 %v38, %v193
  %v232 = vadd.f32 %v39, %v196
  %v233 = vadd.f32 %v40, %v198
  %v234 = vadd.f32 %v41, %v201
  %v235 = vadd.f32 %v42, %v203
  %v236 = vadd.f32 %v43, %v206
  %v237 = vadd.f32 %v44, %v208
  %v238 = vadd.f32 %v45, %v211
  %v239 = vadd.f32 %v46, %v213
  %v240 = vadd.f32 %v47, %v216
  %v241 = vadd.f32 %v48, %v218
  %v242 = vadd.f32 %v49, %v221
  %v243 = vadd.f32 %v50, %v223
  %v244 = vadd.f32 %v51, %v226
  %v245 = vadd.f32 %v52, %v228
  %246 = vst [vmem:[#allocation2] sm:$0xff] %v230
  %247 = vst [vmem:[#allocation2 + $0x8] sm:$0xff] %v231
  %248 = vst [vmem:[#allocation2 + $0x10] sm:$0xff] %v232
  %249 = vst [vmem:[#allocation2 + $0x18] sm:$0xff] %v233
  %250 = vst [vmem:[#allocation2 + $0x20] sm:$0xff] %v234
  %251 = vst [vmem:[#allocation2 + $0x28] sm:$0xff] %v235
  %252 = vst [vmem:[#allocation2 + $0x30] sm:$0xff] %v236
  %253 = vst [vmem:[#allocation2 + $0x38] sm:$0xff] %v237
  %254 = vst [vmem:[#allocation2 + $0x40] sm:$0xff] %v238
  %255 = vst [vmem:[#allocation2 + $0x48] sm:$0xff] %v239
  %256 = vst [vmem:[#allocation2 + $0x50] sm:$0xff] %v240
  %257 = vst [vmem:[#allocation2 + $0x58] sm:$0xff] %v241
  %258 = vst [vmem:[#allocation2 + $0x60] sm:$0xff] %v242
  %259 = vst [vmem:[#allocation2 + $0x68] sm:$0xff] %v243
  %260 = vst [vmem:[#allocation2 + $0x70] sm:$0xff] %v244
  %261 = vst [vmem:[#allocation2 + $0x78] sm:$0xff] %v245
  // Predicated region
  $region22: #{deepgcn_forward.5} parent=0 // pred_check
    %p262 = pneg %p17
  $region23: #{deepgcn_forward.5} parent=0 // pred_check_branch
    %264 = sbr.rel (%p262) target = $region25
  $region24: #{deepgcn_forward.5} parent=0 // pred_region
    %v265 = vld [vmem:[#allocation2] sm:$0xff]
    %v266 = vld [vmem:[#allocation2 + $0x8] sm:$0xff]
    %v267 = vld [vmem:[#allocation2 + $0x10] sm:$0xff]
    %v268 = vld [vmem:[#allocation2 + $0x18] sm:$0xff]
    %v269 = vld [vmem:[#allocation2 + $0x20] sm:$0xff]
    %v270 = vld [vmem:[#allocation2 + $0x28] sm:$0xff]
    %v271 = vld [vmem:[#allocation2 + $0x30] sm:$0xff]
    %v272 = vld [vmem:[#allocation2 + $0x38] sm:$0xff]
    %v273 = vld [vmem:[#allocation2 + $0x40] sm:$0xff]
    %v274 = vld [vmem:[#allocation2 + $0x48] sm:$0xff]
    %v275 = vld [vmem:[#allocation2 + $0x50] sm:$0xff]
    %v276 = vld [vmem:[#allocation2 + $0x58] sm:$0xff]
    %v277 = vld [vmem:[#allocation2 + $0x60] sm:$0xff]
    %v278 = vld [vmem:[#allocation2 + $0x68] sm:$0xff]
    %v279 = vld [vmem:[#allocation2 + $0x70] sm:$0xff]
    %v280 = vld [vmem:[#allocation2 + $0x78] sm:$0xff]
    %v281 = vld [vmem:[%s2] sm:$0x1]
    %v283 = vperm.slane %v281, 0
    %v285 = vadd.f32 %v265, %v283
    %v286 = vadd.f32 %v266, %v283
    %v287 = vadd.f32 %v267, %v283
    %v288 = vadd.f32 %v268, %v283
    %v289 = vadd.f32 %v269, %v283
    %v290 = vadd.f32 %v270, %v283
    %v291 = vadd.f32 %v271, %v283
    %v292 = vadd.f32 %v272, %v283
    %v293 = vadd.f32 %v273, %v283
    %v294 = vadd.f32 %v274, %v283
    %v295 = vadd.f32 %v275, %v283
    %v296 = vadd.f32 %v276, %v283
    %v297 = vadd.f32 %v277, %v283
    %v298 = vadd.f32 %v278, %v283
    %v299 = vadd.f32 %v279, %v283
    %v300 = vadd.f32 %v280, %v283
    %v301 = vpack.c.bf16 %v286, %v285
    %v302 = vpack.c.bf16 %v288, %v287
    %v303 = vpack.c.bf16 %v290, %v289
    %v304 = vpack.c.bf16 %v292, %v291
    %v305 = vpack.c.bf16 %v294, %v293
    %v306 = vpack.c.bf16 %v296, %v295
    %v307 = vpack.c.bf16 %v298, %v297
    %v308 = vpack.c.bf16 %v300, %v299
    %v309 = vld [vmem:[%s3] sm:$0xf]
    %v310 = vld [vmem:[%s3 + $0x4] sm:$0xf]
    %v311 = vld [vmem:[%s3 + $0x8] sm:$0xf]
    %v312 = vld [vmem:[%s3 + $0xc] sm:$0xf]
    %v313 = vld [vmem:[%s3 + $0x10] sm:$0xf]
    %v314 = vld [vmem:[%s3 + $0x14] sm:$0xf]
    %v315 = vld [vmem:[%s3 + $0x18] sm:$0xf]
    %v316 = vld [vmem:[%s3 + $0x1c] sm:$0xf]
    %v317 = vld [vmem:[%s3 + $0x20] sm:$0xf]
    %v318 = vld [vmem:[%s3 + $0x24] sm:$0xf]
    %v319 = vld [vmem:[%s3 + $0x28] sm:$0xf]
    %v320 = vld [vmem:[%s3 + $0x2c] sm:$0xf]
    %v321 = vld [vmem:[%s3 + $0x30] sm:$0xf]
    %v322 = vld [vmem:[%s3 + $0x34] sm:$0xf]
    %v323 = vld [vmem:[%s3 + $0x38] sm:$0xf]
    %v324 = vld [vmem:[%s3 + $0x3c] sm:$0xf]
    %v341 = vunpack.c.l.b16 %v309
    %v342 = vunpack.c.l.b16 %v310
    %v343 = vunpack.c.l.b16 %v311
    %v344 = vunpack.c.l.b16 %v312
    %v345 = vunpack.c.l.b16 %v313
    %v346 = vunpack.c.l.b16 %v314
    %v347 = vunpack.c.l.b16 %v315
    %v348 = vunpack.c.l.b16 %v316
    %v349 = vunpack.c.l.b16 %v317
    %v350 = vunpack.c.l.b16 %v318
    %v351 = vunpack.c.l.b16 %v319
    %v352 = vunpack.c.l.b16 %v320
    %v353 = vunpack.c.l.b16 %v321
    %v354 = vunpack.c.l.b16 %v322
    %v355 = vunpack.c.l.b16 %v323
    %v356 = vunpack.c.l.b16 %v324
    %v357 = vpack.c.b16 %v342, %v341
    %v358 = vpack.c.b16 %v344, %v343
    %v359 = vpack.c.b16 %v346, %v345
    %v360 = vpack.c.b16 %v348, %v347
    %v361 = vpack.c.b16 %v350, %v349
    %v362 = vpack.c.b16 %v352, %v351
    %v363 = vpack.c.b16 %v354, %v353
    %v364 = vpack.c.b16 %v356, %v355
    %373 = vmatpush.bf16.msra.mxu0 %v364
    %374 = vmatpush.bf16.msra.mxu0 %v363
    %375 = vmatpush.bf16.msra.mxu0 %v362
    %376 = vmatpush.bf16.msra.mxu0 %v361
    %377 = vmatpush.bf16.msra.mxu0 %v360
    %378 = vmatpush.bf16.msra.mxu0 %v359
    %379 = vmatpush.bf16.msra.mxu0 %v358
    %380 = vmatpush.bf16.msra.mxu0 %v357
    %381 = vmatmul.bf16.gmra.mxu0 %v301
    %v382 = vpop.f32.mrf.mxu0
    %v383 = vadd.f32 0.0, %v382
    %v384 = vpop.f32.mrf.mxu0
    %v385 = vadd.f32 0.0, %v384
    %386 = vmatmul.bf16.gmra.mxu0 %v302
    %v387 = vpop.f32.mrf.mxu0
    %v388 = vadd.f32 0.0, %v387
    %v389 = vpop.f32.mrf.mxu0
    %v390 = vadd.f32 0.0, %v389
    %391 = vmatmul.bf16.gmra.mxu0 %v303
    %v392 = vpop.f32.mrf.mxu0
    %v393 = vadd.f32 0.0, %v392
    %v394 = vpop.f32.mrf.mxu0
    %v395 = vadd.f32 0.0, %v394
    %396 = vmatmul.bf16.gmra.mxu0 %v304
    %v397 = vpop.f32.mrf.mxu0
    %v398 = vadd.f32 0.0, %v397
    %v399 = vpop.f32.mrf.mxu0
    %v400 = vadd.f32 0.0, %v399
    %401 = vmatmul.bf16.gmra.mxu0 %v305
    %v402 = vpop.f32.mrf.mxu0
    %v403 = vadd.f32 0.0, %v402
    %v404 = vpop.f32.mrf.mxu0
    %v405 = vadd.f32 0.0, %v404
    %406 = vmatmul.bf16.gmra.mxu0 %v306
    %v407 = vpop.f32.mrf.mxu0
    %v408 = vadd.f32 0.0, %v407
    %v409 = vpop.f32.mrf.mxu0
    %v410 = vadd.f32 0.0, %v409
    %411 = vmatmul.bf16.gmra.mxu0 %v307
    %v412 = vpop.f32.mrf.mxu0
    %v413 = vadd.f32 0.0, %v412
    %v414 = vpop.f32.mrf.mxu0
    %v415 = vadd.f32 0.0, %v414
    %416 = vmatmul.bf16.gmra.mxu0 %v308
    %v417 = vpop.f32.mrf.mxu0
    %v418 = vadd.f32 0.0, %v417
    %v419 = vpop.f32.mrf.mxu0
    %v420 = vadd.f32 0.0, %v419
    %421 = vdwg.mxu0
    %v422 = vpack.c.bf16 %v383, %v383
    %v423 = vpack.c.bf16 %v385, %v385
    %v424 = vpack.c.bf16 %v388, %v388
    %v425 = vpack.c.bf16 %v390, %v390
    %v426 = vpack.c.bf16 %v393, %v393
    %v427 = vpack.c.bf16 %v395, %v395
    %v428 = vpack.c.bf16 %v398, %v398
    %v429 = vpack.c.bf16 %v400, %v400
    %v430 = vpack.c.bf16 %v403, %v403
    %v431 = vpack.c.bf16 %v405, %v405
    %v432 = vpack.c.bf16 %v408, %v408
    %v433 = vpack.c.bf16 %v410, %v410
    %v434 = vpack.c.bf16 %v413, %v413
    %v435 = vpack.c.bf16 %v415, %v415
    %v436 = vpack.c.bf16 %v418, %v418
    %v437 = vpack.c.bf16 %v420, %v420
    %438 = vst [vmem:[%s4] sm:$0xf] %v422
    %439 = vst [vmem:[%s4 + $0x4] sm:$0xf] %v423
    %440 = vst [vmem:[%s4 + $0x8] sm:$0xf] %v424
    %441 = vst [vmem:[%s4 + $0xc] sm:$0xf] %v425
    %442 = vst [vmem:[%s4 + $0x10] sm:$0xf] %v426
    %443 = vst [vmem:[%s4 + $0x14] sm:$0xf] %v427
    %444 = vst [vmem:[%s4 + $0x18] sm:$0xf] %v428
    %445 = vst [vmem:[%s4 + $0x1c] sm:$0xf] %v429
    %446 = vst [vmem:[%s4 + $0x20] sm:$0xf] %v430
    %447 = vst [vmem:[%s4 + $0x24] sm:$0xf] %v431
    %448 = vst [vmem:[%s4 + $0x28] sm:$0xf] %v432
    %449 = vst [vmem:[%s4 + $0x2c] sm:$0xf] %v433
    %450 = vst [vmem:[%s4 + $0x30] sm:$0xf] %v434
    %451 = vst [vmem:[%s4 + $0x34] sm:$0xf] %v435
    %452 = vst [vmem:[%s4 + $0x38] sm:$0xf] %v436
    %453 = vst [vmem:[%s4 + $0x3c] sm:$0xf] %v437
  $region25: #{deepgcn_forward.5} parent=0 // pred_fallthru
    _
  // Predicated region
  $region26: #{deepgcn_forward.5} parent=0 // pred_check
    _
  $region27: #{deepgcn_forward.5} parent=0 // pred_check_branch
    %455 = sbr.rel (0) target = $region29
  $region28: #{deepgcn_forward.5} parent=0 // pred_region
    _
  $region29: #{deepgcn_forward.5} parent=0 // pred_fallthru
    _
  // Predicated region
  $region30: #{deepgcn_forward.5} parent=0 // pred_check
    _
  $region31: #{deepgcn_forward.5} parent=0 // pred_check_branch
    %457 = sbr.rel (0) target = $region33
  $region32: #{deepgcn_forward.5} parent=0 // pred_region
    _
  $region33: #{deepgcn_forward.5} parent=0 // pred_fallthru
    _

// kernel: deepgcn_forward.7
$region0: #{deepgcn_forward.7}
  #allocation0 [shape = 'u32[]', space=smem, size = 0x4, offset = 0x4, fixed_abs, tag = 'smem constant byte address 0x4 - core index']
  #allocation1 [shape = 'u32[72,128]{1,0:T(1,128)}', space=vmem, size = 0x9000, scoped, tag = 'internal scratch']
  #allocation2 [shape = 'bf16[128,128]{1,0:T(8,128)(2,1)}', space=vmem, size = 0x8000, scoped, tag = 'scratch operand']
  %s0 = inlined_call_operand.vmem [shape: f32[1,128], index: 0, kind: input, shape index: {}]
  %s1 = inlined_call_operand.vmem [shape: f32[128,128], index: 1, kind: input, shape index: {}]
  %s2 = inlined_call_operand.vmem [shape: f32[1,128], index: 2, kind: input, shape index: {}]
  %s3 = inlined_call_operand.vmem [shape: f32[1,128], index: 3, kind: input, shape index: {}]
  %s4 = inlined_call_operand.vmem [shape: bf16[128,128], index: 4, kind: input, shape index: {}]
  %s5 = inlined_call_operand.vmem [shape: f32[1,128], index: 5, kind: input, shape index: {}]
  %s6 = inlined_call_operand.vmem [shape: bf16[128,128], index: 6, kind: input, shape index: {}]
  %s7 = inlined_call_operand.vmem [shape: f32[128,128], index: 7, kind: output, shape index: {}]
  %s8 = sld [smem:[#allocation0]]
  $region42: #{deepgcn_forward.7} parent=0
    _
  %s10 = ssub.s32 1, %s8
  %s11 = scalar_select 0, %s10, %s8
  // Predicated region
  $region2: #{deepgcn_forward.7} parent=0 // pred_check
    _
  $region3: #{deepgcn_forward.7} parent=0 // pred_check_branch
    %13 = sbr.rel (0) target = $region5
  $region4: #{deepgcn_forward.7} parent=0 // pred_region
    _
  $region5: #{deepgcn_forward.7} parent=0 // pred_fallthru
    _
  // Predicated region
  $region6: #{deepgcn_forward.7} parent=0 // pred_check
    _
  $region7: #{deepgcn_forward.7} parent=0 // pred_check_branch
    %15 = sbr.rel (0) target = $region9
  $region8: #{deepgcn_forward.7} parent=0 // pred_region
    _
  $region9: #{deepgcn_forward.7} parent=0 // pred_fallthru
    _
  // Predicated region
  $region10: #{deepgcn_forward.7} parent=0 // pred_check
    _
  $region11: #{deepgcn_forward.7} parent=0 // pred_check_branch
    %17 = sbr.rel (0) target = $region13
  $region12: #{deepgcn_forward.7} parent=0 // pred_region
    _
  $region13: #{deepgcn_forward.7} parent=0 // pred_fallthru
    _
  // Predicated region
  $region14: #{deepgcn_forward.7} parent=0 // pred_check
    _
  $region15: #{deepgcn_forward.7} parent=0 // pred_check_branch
    %19 = sbr.rel (0) target = $region17
  $region16: #{deepgcn_forward.7} parent=0 // pred_region
    _
  $region17: #{deepgcn_forward.7} parent=0 // pred_fallthru
    _
  // Predicated region
  $region18: #{deepgcn_forward.7} parent=0 // pred_check
    _
  $region19: #{deepgcn_forward.7} parent=0 // pred_check_branch
    %21 = sbr.rel (0) target = $region21
  $region20: #{deepgcn_forward.7} parent=0 // pred_region
    _
  $region21: #{deepgcn_forward.7} parent=0 // pred_fallthru
    _
  // Predicated region
  $region22: #{deepgcn_forward.7} parent=0 // pred_check
    _
  $region23: #{deepgcn_forward.7} parent=0 // pred_check_branch
    %23 = sbr.rel (0) target = $region25
  $region24: #{deepgcn_forward.7} parent=0 // pred_region
    _
  $region25: #{deepgcn_forward.7} parent=0 // pred_fallthru
    _
  // Predicated region
  $region26: #{deepgcn_forward.7} parent=0 // pred_check
    _
  $region27: #{deepgcn_forward.7} parent=0 // pred_check_branch
    %25 = sbr.rel (0) target = $region29
  $region28: #{deepgcn_forward.7} parent=0 // pred_region
    _
  $region29: #{deepgcn_forward.7} parent=0 // pred_fallthru
    _
  %p26 = scmp.eq.s32.totalorder 0, 0
  // Predicated region
  $region30: #{deepgcn_forward.7} parent=0 // pred_check
    %p27 = pneg %p26
  $region31: #{deepgcn_forward.7} parent=0 // pred_check_branch
    %29 = sbr.rel (%p27) target = $region33
  $region32: #{deepgcn_forward.7} parent=0 // pred_region
    %v30 = vld [vmem:[%s1] sm:$0xff]
    %v31 = vld [vmem:[%s1 + $0x8] sm:$0xff]
    %v32 = vld [vmem:[%s1 + $0x10] sm:$0xff]
    %v33 = vld [vmem:[%s1 + $0x18] sm:$0xff]
    %v34 = vld [vmem:[%s1 + $0x20] sm:$0xff]
    %v35 = vld [vmem:[%s1 + $0x28] sm:$0xff]
    %v36 = vld [vmem:[%s1 + $0x30] sm:$0xff]
    %v37 = vld [vmem:[%s1 + $0x38] sm:$0xff]
    %v38 = vld [vmem:[%s1 + $0x40] sm:$0xff]
    %v39 = vld [vmem:[%s1 + $0x48] sm:$0xff]
    %v40 = vld [vmem:[%s1 + $0x50] sm:$0xff]
    %v41 = vld [vmem:[%s1 + $0x58] sm:$0xff]
    %v42 = vld [vmem:[%s1 + $0x60] sm:$0xff]
    %v43 = vld [vmem:[%s1 + $0x68] sm:$0xff]
    %v44 = vld [vmem:[%s1 + $0x70] sm:$0xff]
    %v45 = vld [vmem:[%s1 + $0x78] sm:$0xff]
    %46 = vadd.xlane.f32.xlu0 %v30
    %v47 = vpop.xlane.xlu0 %46
    %48 = vadd.xlane.f32.xlu0 %v31
    %v49 = vpop.xlane.xlu0 %48
    %50 = vadd.xlane.f32.xlu0 %v32
    %v51 = vpop.xlane.xlu0 %50
    %52 = vadd.xlane.f32.xlu0 %v33
    %v53 = vpop.xlane.xlu0 %52
    %54 = vadd.xlane.f32.xlu0 %v34
    %v55 = vpop.xlane.xlu0 %54
    %56 = vadd.xlane.f32.xlu0 %v35
    %v57 = vpop.xlane.xlu0 %56
    %58 = vadd.xlane.f32.xlu0 %v36
    %v59 = vpop.xlane.xlu0 %58
    %60 = vadd.xlane.f32.xlu0 %v37
    %v61 = vpop.xlane.xlu0 %60
    %62 = vadd.xlane.f32.xlu0 %v38
    %v63 = vpop.xlane.xlu0 %62
    %64 = vadd.xlane.f32.xlu0 %v39
    %v65 = vpop.xlane.xlu0 %64
    %66 = vadd.xlane.f32.xlu0 %v40
    %v67 = vpop.xlane.xlu0 %66
    %68 = vadd.xlane.f32.xlu0 %v41
    %v69 = vpop.xlane.xlu0 %68
    %70 = vadd.xlane.f32.xlu0 %v42
    %v71 = vpop.xlane.xlu0 %70
    %72 = vadd.xlane.f32.xlu0 %v43
    %v73 = vpop.xlane.xlu0 %72
    %74 = vadd.xlane.f32.xlu0 %v44
    %v75 = vpop.xlane.xlu0 %74
    %76 = vadd.xlane.f32.xlu0 %v45
    %v77 = vpop.xlane.xlu0 %76
    %v78 = vmul.f32 %v47, 0.03125
    %v79 = vmul.f32 %v49, 0.03125
    %v80 = vmul.f32 %v51, 0.03125
    %v81 = vmul.f32 %v53, 0.03125
    %v82 = vmul.f32 %v55, 0.03125
    %v83 = vmul.f32 %v57, 0.03125
    %v84 = vmul.f32 %v59, 0.03125
    %v85 = vmul.f32 %v61, 0.03125
    %v86 = vmul.f32 %v63, 0.03125
    %v87 = vmul.f32 %v65, 0.03125
    %v88 = vmul.f32 %v67, 0.03125
    %v89 = vmul.f32 %v69, 0.03125
    %v90 = vmul.f32 %v71, 0.03125
    %v91 = vmul.f32 %v73, 0.03125
    %v92 = vmul.f32 %v75, 0.03125
    %v93 = vmul.f32 %v77, 0.03125
    %v94 = vsub.f32 %v30, %v78
    %v95 = vsub.f32 %v31, %v79
    %v96 = vsub.f32 %v32, %v80
    %v97 = vsub.f32 %v33, %v81
    %v98 = vsub.f32 %v34, %v82
    %v99 = vsub.f32 %v35, %v83
    %v100 = vsub.f32 %v36, %v84
    %v101 = vsub.f32 %v37, %v85
    %v102 = vsub.f32 %v38, %v86
    %v103 = vsub.f32 %v39, %v87
    %v104 = vsub.f32 %v40, %v88
    %v105 = vsub.f32 %v41, %v89
    %v106 = vsub.f32 %v42, %v90
    %v107 = vsub.f32 %v43, %v91
    %v108 = vsub.f32 %v44, %v92
    %v109 = vsub.f32 %v45, %v93
    %v110 = vld [vmem:[%s0] sm:$0x1]
    %v112 = vperm.slane %v110, 0
    %v114 = vmul.f32 %v94, %v112
    %v115 = vmul.f32 %v95, %v112
    %v116 = vmul.f32 %v96, %v112
    %v117 = vmul.f32 %v97, %v112
    %v118 = vmul.f32 %v98, %v112
    %v119 = vmul.f32 %v99, %v112
    %v120 = vmul.f32 %v100, %v112
    %v121 = vmul.f32 %v101, %v112
    %v122 = vmul.f32 %v102, %v112
    %v123 = vmul.f32 %v103, %v112
    %v124 = vmul.f32 %v104, %v112
    %v125 = vmul.f32 %v105, %v112
    %v126 = vmul.f32 %v106, %v112
    %v127 = vmul.f32 %v107, %v112
    %v128 = vmul.f32 %v108, %v112
    %v129 = vmul.f32 %v109, %v112
    %v130 = vmul.f32 %v114, %v114
    %v131 = vmul.f32 %v115, %v115
    %v132 = vmul.f32 %v116, %v116
    %v133 = vmul.f32 %v117, %v117
    %v134 = vmul.f32 %v118, %v118
    %v135 = vmul.f32 %v119, %v119
    %v136 = vmul.f32 %v120, %v120
    %v137 = vmul.f32 %v121, %v121
    %v138 = vmul.f32 %v122, %v122
    %v139 = vmul.f32 %v123, %v123
    %v140 = vmul.f32 %v124, %v124
    %v141 = vmul.f32 %v125, %v125
    %v142 = vmul.f32 %v126, %v126
    %v143 = vmul.f32 %v127, %v127
    %v144 = vmul.f32 %v128, %v128
    %v145 = vmul.f32 %v129, %v129
    %146 = vadd.xlane.f32.xlu0 %v130
    %v147 = vpop.xlane.xlu0 %146
    %148 = vadd.xlane.f32.xlu0 %v131
    %v149 = vpop.xlane.xlu0 %148
    %150 = vadd.xlane.f32.xlu0 %v132
    %v151 = vpop.xlane.xlu0 %150
    %152 = vadd.xlane.f32.xlu0 %v133
    %v153 = vpop.xlane.xlu0 %152
    %154 = vadd.xlane.f32.xlu0 %v134
    %v155 = vpop.xlane.xlu0 %154
    %156 = vadd.xlane.f32.xlu0 %v135
    %v157 = vpop.xlane.xlu0 %156
    %158 = vadd.xlane.f32.xlu0 %v136
    %v159 = vpop.xlane.xlu0 %158
    %160 = vadd.xlane.f32.xlu0 %v137
    %v161 = vpop.xlane.xlu0 %160
    %162 = vadd.xlane.f32.xlu0 %v138
    %v163 = vpop.xlane.xlu0 %162
    %164 = vadd.xlane.f32.xlu0 %v139
    %v165 = vpop.xlane.xlu0 %164
    %166 = vadd.xlane.f32.xlu0 %v140
    %v167 = vpop.xlane.xlu0 %166
    %168 = vadd.xlane.f32.xlu0 %v141
    %v169 = vpop.xlane.xlu0 %168
    %170 = vadd.xlane.f32.xlu0 %v142
    %v171 = vpop.xlane.xlu0 %170
    %172 = vadd.xlane.f32.xlu0 %v143
    %v173 = vpop.xlane.xlu0 %172
    %174 = vadd.xlane.f32.xlu0 %v144
    %v175 = vpop.xlane.xlu0 %174
    %176 = vadd.xlane.f32.xlu0 %v145
    %v177 = vpop.xlane.xlu0 %176
    %v178 = vmul.f32 %v147, 0.03125
    %v179 = vmul.f32 %v149, 0.03125
    %v180 = vmul.f32 %v151, 0.03125
    %v181 = vmul.f32 %v153, 0.03125
    %v182 = vmul.f32 %v155, 0.03125
    %v183 = vmul.f32 %v157, 0.03125
    %v184 = vmul.f32 %v159, 0.03125
    %v185 = vmul.f32 %v161, 0.03125
    %v186 = vmul.f32 %v163, 0.03125
    %v187 = vmul.f32 %v165, 0.03125
    %v188 = vmul.f32 %v167, 0.03125
    %v189 = vmul.f32 %v169, 0.03125
    %v190 = vmul.f32 %v171, 0.03125
    %v191 = vmul.f32 %v173, 0.03125
    %v192 = vmul.f32 %v175, 0.03125
    %v193 = vmul.f32 %v177, 0.03125
    %v194 = vadd.f32 %v178, 1e-05
    %v195 = vadd.f32 %v179, 1e-05
    %v196 = vadd.f32 %v180, 1e-05
    %v197 = vadd.f32 %v181, 1e-05
    %v198 = vadd.f32 %v182, 1e-05
    %v199 = vadd.f32 %v183, 1e-05
    %v200 = vadd.f32 %v184, 1e-05
    %v201 = vadd.f32 %v185, 1e-05
    %v202 = vadd.f32 %v186, 1e-05
    %v203 = vadd.f32 %v187, 1e-05
    %v204 = vadd.f32 %v188, 1e-05
    %v205 = vadd.f32 %v189, 1e-05
    %v206 = vadd.f32 %v190, 1e-05
    %v207 = vadd.f32 %v191, 1e-05
    %v208 = vadd.f32 %v192, 1e-05
    %v209 = vadd.f32 %v193, 1e-05
    %v210 = vrsqrt.pop %v194
    %v211 = vmul.f32 %v210, %v194
    %v212 = vmul.f32 %v211, %v210
    %v213 = vmul.f32 0.5, %v212
    %v214 = vsub.f32 1.5, %v213
    %v215 = vmul.f32 %v210, %v214
    %vm216 = vweird.f32 %v194
    %vm217 = vweird.f32 %v210
    %vm218 = vmor %vm216, %vm217
    %v219 = vsel %vm218, %v210, %v215
    %v220 = vrsqrt.pop %v195
    %v221 = vmul.f32 %v220, %v195
    %v222 = vmul.f32 %v221, %v220
    %v223 = vmul.f32 0.5, %v222
    %v224 = vsub.f32 1.5, %v223
    %v225 = vmul.f32 %v220, %v224
    %vm226 = vweird.f32 %v195
    %vm227 = vweird.f32 %v220
    %vm228 = vmor %vm226, %vm227
    %v229 = vsel %vm228, %v220, %v225
    %v230 = vrsqrt.pop %v196
    %v231 = vmul.f32 %v230, %v196
    %v232 = vmul.f32 %v231, %v230
    %v233 = vmul.f32 0.5, %v232
    %v234 = vsub.f32 1.5, %v233
    %v235 = vmul.f32 %v230, %v234
    %vm236 = vweird.f32 %v196
    %vm237 = vweird.f32 %v230
    %vm238 = vmor %vm236, %vm237
    %v239 = vsel %vm238, %v230, %v235
    %v240 = vrsqrt.pop %v197
    %v241 = vmul.f32 %v240, %v197
    %v242 = vmul.f32 %v241, %v240
    %v243 = vmul.f32 0.5, %v242
    %v244 = vsub.f32 1.5, %v243
    %v245 = vmul.f32 %v240, %v244
    %vm246 = vweird.f32 %v197
    %vm247 = vweird.f32 %v240
    %vm248 = vmor %vm246, %vm247
    %v249 = vsel %vm248, %v240, %v245
    %v250 = vrsqrt.pop %v198
    %v251 = vmul.f32 %v250, %v198
    %v252 = vmul.f32 %v251, %v250
    %v253 = vmul.f32 0.5, %v252
    %v254 = vsub.f32 1.5, %v253
    %v255 = vmul.f32 %v250, %v254
    %vm256 = vweird.f32 %v198
    %vm257 = vweird.f32 %v250
    %vm258 = vmor %vm256, %vm257
    %v259 = vsel %vm258, %v250, %v255
    %v260 = vrsqrt.pop %v199
    %v261 = vmul.f32 %v260, %v199
    %v262 = vmul.f32 %v261, %v260
    %v263 = vmul.f32 0.5, %v262
    %v264 = vsub.f32 1.5, %v263
    %v265 = vmul.f32 %v260, %v264
    %vm266 = vweird.f32 %v199
    %vm267 = vweird.f32 %v260
    %vm268 = vmor %vm266, %vm267
    %v269 = vsel %vm268, %v260, %v265
    %v270 = vrsqrt.pop %v200
    %v271 = vmul.f32 %v270, %v200
    %v272 = vmul.f32 %v271, %v270
    %v273 = vmul.f32 0.5, %v272
    %v274 = vsub.f32 1.5, %v273
    %v275 = vmul.f32 %v270, %v274
    %vm276 = vweird.f32 %v200
    %vm277 = vweird.f32 %v270
    %vm278 = vmor %vm276, %vm277
    %v279 = vsel %vm278, %v270, %v275
    %v280 = vrsqrt.pop %v201
    %v281 = vmul.f32 %v280, %v201
    %v282 = vmul.f32 %v281, %v280
    %v283 = vmul.f32 0.5, %v282
    %v284 = vsub.f32 1.5, %v283
    %v285 = vmul.f32 %v280, %v284
    %vm286 = vweird.f32 %v201
    %vm287 = vweird.f32 %v280
    %vm288 = vmor %vm286, %vm287
    %v289 = vsel %vm288, %v280, %v285
    %v290 = vrsqrt.pop %v202
    %v291 = vmul.f32 %v290, %v202
    %v292 = vmul.f32 %v291, %v290
    %v293 = vmul.f32 0.5, %v292
    %v294 = vsub.f32 1.5, %v293
    %v295 = vmul.f32 %v290, %v294
    %vm296 = vweird.f32 %v202
    %vm297 = vweird.f32 %v290
    %vm298 = vmor %vm296, %vm297
    %v299 = vsel %vm298, %v290, %v295
    %v300 = vrsqrt.pop %v203
    %v301 = vmul.f32 %v300, %v203
    %v302 = vmul.f32 %v301, %v300
    %v303 = vmul.f32 0.5, %v302
    %v304 = vsub.f32 1.5, %v303
    %v305 = vmul.f32 %v300, %v304
    %vm306 = vweird.f32 %v203
    %vm307 = vweird.f32 %v300
    %vm308 = vmor %vm306, %vm307
    %v309 = vsel %vm308, %v300, %v305
    %v310 = vrsqrt.pop %v204
    %v311 = vmul.f32 %v310, %v204
    %v312 = vmul.f32 %v311, %v310
    %v313 = vmul.f32 0.5, %v312
    %v314 = vsub.f32 1.5, %v313
    %v315 = vmul.f32 %v310, %v314
    %vm316 = vweird.f32 %v204
    %vm317 = vweird.f32 %v310
    %vm318 = vmor %vm316, %vm317
    %v319 = vsel %vm318, %v310, %v315
    %v320 = vrsqrt.pop %v205
    %v321 = vmul.f32 %v320, %v205
    %v322 = vmul.f32 %v321, %v320
    %v323 = vmul.f32 0.5, %v322
    %v324 = vsub.f32 1.5, %v323
    %v325 = vmul.f32 %v320, %v324
    %vm326 = vweird.f32 %v205
    %vm327 = vweird.f32 %v320
    %vm328 = vmor %vm326, %vm327
    %v329 = vsel %vm328, %v320, %v325
    %v330 = vrsqrt.pop %v206
    %v331 = vmul.f32 %v330, %v206
    %v332 = vmul.f32 %v331, %v330
    %v333 = vmul.f32 0.5, %v332
    %v334 = vsub.f32 1.5, %v333
    %v335 = vmul.f32 %v330, %v334
    %vm336 = vweird.f32 %v206
    %vm337 = vweird.f32 %v330
    %vm338 = vmor %vm336, %vm337
    %v339 = vsel %vm338, %v330, %v335
    %v340 = vrsqrt.pop %v207
    %v341 = vmul.f32 %v340, %v207
    %v342 = vmul.f32 %v341, %v340
    %v343 = vmul.f32 0.5, %v342
    %v344 = vsub.f32 1.5, %v343
    %v345 = vmul.f32 %v340, %v344
    %vm346 = vweird.f32 %v207
    %vm347 = vweird.f32 %v340
    %vm348 = vmor %vm346, %vm347
    %v349 = vsel %vm348, %v340, %v345
    %v350 = vrsqrt.pop %v208
    %v351 = vmul.f32 %v350, %v208
    %v352 = vmul.f32 %v351, %v350
    %v353 = vmul.f32 0.5, %v352
    %v354 = vsub.f32 1.5, %v353
    %v355 = vmul.f32 %v350, %v354
    %vm356 = vweird.f32 %v208
    %vm357 = vweird.f32 %v350
    %vm358 = vmor %vm356, %vm357
    %v359 = vsel %vm358, %v350, %v355
    %v360 = vrsqrt.pop %v209
    %v361 = vmul.f32 %v360, %v209
    %v362 = vmul.f32 %v361, %v360
    %v363 = vmul.f32 0.5, %v362
    %v364 = vsub.f32 1.5, %v363
    %v365 = vmul.f32 %v360, %v364
    %vm366 = vweird.f32 %v209
    %vm367 = vweird.f32 %v360
    %vm368 = vmor %vm366, %vm367
    %v369 = vsel %vm368, %v360, %v365
    %v370 = vmul.f32 %v114, %v219
    %v371 = vmul.f32 %v115, %v229
    %v372 = vmul.f32 %v116, %v239
    %v373 = vmul.f32 %v117, %v249
    %v374 = vmul.f32 %v118, %v259
    %v375 = vmul.f32 %v119, %v269
    %v376 = vmul.f32 %v120, %v279
    %v377 = vmul.f32 %v121, %v289
    %v378 = vmul.f32 %v122, %v299
    %v379 = vmul.f32 %v123, %v309
    %v380 = vmul.f32 %v124, %v319
    %v381 = vmul.f32 %v125, %v329
    %v382 = vmul.f32 %v126, %v339
    %v383 = vmul.f32 %v127, %v349
    %v384 = vmul.f32 %v128, %v359
    %v385 = vmul.f32 %v129, %v369
    %v386 = vld [vmem:[%s2] sm:$0x1]
    %v388 = vperm.slane %v386, 0
    %v390 = vmul.f32 %v370, %v388
    %v391 = vmul.f32 %v371, %v388
    %v392 = vmul.f32 %v372, %v388
    %v393 = vmul.f32 %v373, %v388
    %v394 = vmul.f32 %v374, %v388
    %v395 = vmul.f32 %v375, %v388
    %v396 = vmul.f32 %v376, %v388
    %v397 = vmul.f32 %v377, %v388
    %v398 = vmul.f32 %v378, %v388
    %v399 = vmul.f32 %v379, %v388
    %v400 = vmul.f32 %v380, %v388
    %v401 = vmul.f32 %v381, %v388
    %v402 = vmul.f32 %v382, %v388
    %v403 = vmul.f32 %v383, %v388
    %v404 = vmul.f32 %v384, %v388
    %v405 = vmul.f32 %v385, %v388
    %v406 = vld [vmem:[%s3] sm:$0x1]
    %v408 = vperm.slane %v406, 0
    %v410 = vadd.f32 %v390, %v408
    %v411 = vadd.f32 %v391, %v408
    %v412 = vadd.f32 %v392, %v408
    %v413 = vadd.f32 %v393, %v408
    %v414 = vadd.f32 %v394, %v408
    %v415 = vadd.f32 %v395, %v408
    %v416 = vadd.f32 %v396, %v408
    %v417 = vadd.f32 %v397, %v408
    %v418 = vadd.f32 %v398, %v408
    %v419 = vadd.f32 %v399, %v408
    %v420 = vadd.f32 %v400, %v408
    %v421 = vadd.f32 %v401, %v408
    %v422 = vadd.f32 %v402, %v408
    %v423 = vadd.f32 %v403, %v408
    %v424 = vadd.f32 %v404, %v408
    %v425 = vadd.f32 %v405, %v408
    %v426 = vmax.f32 %v410, 0.0
    %v427 = vmax.f32 %v411, 0.0
    %v428 = vmax.f32 %v412, 0.0
    %v429 = vmax.f32 %v413, 0.0
    %v430 = vmax.f32 %v414, 0.0
    %v431 = vmax.f32 %v415, 0.0
    %v432 = vmax.f32 %v416, 0.0
    %v433 = vmax.f32 %v417, 0.0
    %v434 = vmax.f32 %v418, 0.0
    %v435 = vmax.f32 %v419, 0.0
    %v436 = vmax.f32 %v420, 0.0
    %v437 = vmax.f32 %v421, 0.0
    %v438 = vmax.f32 %v422, 0.0
    %v439 = vmax.f32 %v423, 0.0
    %v440 = vmax.f32 %v424, 0.0
    %v441 = vmax.f32 %v425, 0.0
    %v442 = vpack.c.bf16 %v427, %v426
    %v443 = vpack.c.bf16 %v429, %v428
    %v444 = vpack.c.bf16 %v431, %v430
    %v445 = vpack.c.bf16 %v433, %v432
    %v446 = vpack.c.bf16 %v435, %v434
    %v447 = vpack.c.bf16 %v437, %v436
    %v448 = vpack.c.bf16 %v439, %v438
    %v449 = vpack.c.bf16 %v441, %v440
    %v450 = vld [vmem:[%s4] sm:$0xf]
    %v451 = vld [vmem:[%s4 + $0x4] sm:$0xf]
    %v452 = vld [vmem:[%s4 + $0x8] sm:$0xf]
    %v453 = vld [vmem:[%s4 + $0xc] sm:$0xf]
    %v454 = vld [vmem:[%s4 + $0x10] sm:$0xf]
    %v455 = vld [vmem:[%s4 + $0x14] sm:$0xf]
    %v456 = vld [vmem:[%s4 + $0x18] sm:$0xf]
    %v457 = vld [vmem:[%s4 + $0x1c] sm:$0xf]
    %v458 = vld [vmem:[%s4 + $0x20] sm:$0xf]
    %v459 = vld [vmem:[%s4 + $0x24] sm:$0xf]
    %v460 = vld [vmem:[%s4 + $0x28] sm:$0xf]
    %v461 = vld [vmem:[%s4 + $0x2c] sm:$0xf]
    %v462 = vld [vmem:[%s4 + $0x30] sm:$0xf]
    %v463 = vld [vmem:[%s4 + $0x34] sm:$0xf]
    %v464 = vld [vmem:[%s4 + $0x38] sm:$0xf]
    %v465 = vld [vmem:[%s4 + $0x3c] sm:$0xf]
    %v482 = vunpack.c.l.b16 %v450
    %v483 = vunpack.c.l.b16 %v451
    %v484 = vunpack.c.l.b16 %v452
    %v485 = vunpack.c.l.b16 %v453
    %v486 = vunpack.c.l.b16 %v454
    %v487 = vunpack.c.l.b16 %v455
    %v488 = vunpack.c.l.b16 %v456
    %v489 = vunpack.c.l.b16 %v457
    %v490 = vunpack.c.l.b16 %v458
    %v491 = vunpack.c.l.b16 %v459
    %v492 = vunpack.c.l.b16 %v460
    %v493 = vunpack.c.l.b16 %v461
    %v494 = vunpack.c.l.b16 %v462
    %v495 = vunpack.c.l.b16 %v463
    %v496 = vunpack.c.l.b16 %v464
    %v497 = vunpack.c.l.b16 %v465
    %v498 = vpack.c.b16 %v483, %v482
    %v499 = vpack.c.b16 %v485, %v484
    %v500 = vpack.c.b16 %v487, %v486
    %v501 = vpack.c.b16 %v489, %v488
    %v502 = vpack.c.b16 %v491, %v490
    %v503 = vpack.c.b16 %v493, %v492
    %v504 = vpack.c.b16 %v495, %v494
    %v505 = vpack.c.b16 %v497, %v496
    %514 = vmatpush.bf16.msra.mxu0 %v505
    %515 = vmatpush.bf16.msra.mxu0 %v504
    %516 = vmatpush.bf16.msra.mxu0 %v503
    %517 = vmatpush.bf16.msra.mxu0 %v502
    %518 = vmatpush.bf16.msra.mxu0 %v501
    %519 = vmatpush.bf16.msra.mxu0 %v500
    %520 = vmatpush.bf16.msra.mxu0 %v499
    %521 = vmatpush.bf16.msra.mxu0 %v498
    %522 = vmatmul.bf16.gmra.mxu0 %v442
    %v523 = vpop.f32.mrf.mxu0
    %v524 = vadd.f32 0.0, %v523
    %v525 = vpop.f32.mrf.mxu0
    %v526 = vadd.f32 0.0, %v525
    %527 = vmatmul.bf16.gmra.mxu0 %v443
    %v528 = vpop.f32.mrf.mxu0
    %v529 = vadd.f32 0.0, %v528
    %v530 = vpop.f32.mrf.mxu0
    %v531 = vadd.f32 0.0, %v530
    %532 = vmatmul.bf16.gmra.mxu0 %v444
    %v533 = vpop.f32.mrf.mxu0
    %v534 = vadd.f32 0.0, %v533
    %v535 = vpop.f32.mrf.mxu0
    %v536 = vadd.f32 0.0, %v535
    %537 = vmatmul.bf16.gmra.mxu0 %v445
    %v538 = vpop.f32.mrf.mxu0
    %v539 = vadd.f32 0.0, %v538
    %v540 = vpop.f32.mrf.mxu0
    %v541 = vadd.f32 0.0, %v540
    %542 = vmatmul.bf16.gmra.mxu0 %v446
    %v543 = vpop.f32.mrf.mxu0
    %v544 = vadd.f32 0.0, %v543
    %v545 = vpop.f32.mrf.mxu0
    %v546 = vadd.f32 0.0, %v545
    %547 = vmatmul.bf16.gmra.mxu0 %v447
    %v548 = vpop.f32.mrf.mxu0
    %v549 = vadd.f32 0.0, %v548
    %v550 = vpop.f32.mrf.mxu0
    %v551 = vadd.f32 0.0, %v550
    %552 = vmatmul.bf16.gmra.mxu0 %v448
    %v553 = vpop.f32.mrf.mxu0
    %v554 = vadd.f32 0.0, %v553
    %v555 = vpop.f32.mrf.mxu0
    %v556 = vadd.f32 0.0, %v555
    %557 = vmatmul.bf16.gmra.mxu0 %v449
    %v558 = vpop.f32.mrf.mxu0
    %v559 = vadd.f32 0.0, %v558
    %v560 = vpop.f32.mrf.mxu0
    %v561 = vadd.f32 0.0, %v560
    %562 = vdwg.mxu0
    %v563 = vpack.c.bf16 %v524, %v524
    %v564 = vpack.c.bf16 %v526, %v526
    %v565 = vpack.c.bf16 %v529, %v529
    %v566 = vpack.c.bf16 %v531, %v531
    %v567 = vpack.c.bf16 %v534, %v534
    %v568 = vpack.c.bf16 %v536, %v536
    %v569 = vpack.c.bf16 %v539, %v539
    %v570 = vpack.c.bf16 %v541, %v541
    %v571 = vpack.c.bf16 %v544, %v544
    %v572 = vpack.c.bf16 %v546, %v546
    %v573 = vpack.c.bf16 %v549, %v549
    %v574 = vpack.c.bf16 %v551, %v551
    %v575 = vpack.c.bf16 %v554, %v554
    %v576 = vpack.c.bf16 %v556, %v556
    %v577 = vpack.c.bf16 %v559, %v559
    %v578 = vpack.c.bf16 %v561, %v561
    %579 = vst [vmem:[#allocation2] sm:$0xf] %v563
    %580 = vst [vmem:[#allocation2 + $0x4] sm:$0xf] %v564
    %581 = vst [vmem:[#allocation2 + $0x8] sm:$0xf] %v565
    %582 = vst [vmem:[#allocation2 + $0xc] sm:$0xf] %v566
    %583 = vst [vmem:[#allocation2 + $0x10] sm:$0xf] %v567
    %584 = vst [vmem:[#allocation2 + $0x14] sm:$0xf] %v568
    %585 = vst [vmem:[#allocation2 + $0x18] sm:$0xf] %v569
    %586 = vst [vmem:[#allocation2 + $0x1c] sm:$0xf] %v570
    %587 = vst [vmem:[#allocation2 + $0x20] sm:$0xf] %v571
    %588 = vst [vmem:[#allocation2 + $0x24] sm:$0xf] %v572
    %589 = vst [vmem:[#allocation2 + $0x28] sm:$0xf] %v573
    %590 = vst [vmem:[#allocation2 + $0x2c] sm:$0xf] %v574
    %591 = vst [vmem:[#allocation2 + $0x30] sm:$0xf] %v575
    %592 = vst [vmem:[#allocation2 + $0x34] sm:$0xf] %v576
    %593 = vst [vmem:[#allocation2 + $0x38] sm:$0xf] %v577
    %594 = vst [vmem:[#allocation2 + $0x3c] sm:$0xf] %v578
  $region33: #{deepgcn_forward.7} parent=0 // pred_fallthru
    _
  %s595 = smul.u32 0, 128
  %s596 = scalar_lea.vmem %s1, %s595
  %v597 = vld [vmem:[%s596] sm:$0xff]
  %v598 = vld [vmem:[%s596 + $0x8] sm:$0xff]
  %v599 = vld [vmem:[%s596 + $0x10] sm:$0xff]
  %v600 = vld [vmem:[%s596 + $0x18] sm:$0xff]
  %v601 = vld [vmem:[%s596 + $0x20] sm:$0xff]
  %v602 = vld [vmem:[%s596 + $0x28] sm:$0xff]
  %v603 = vld [vmem:[%s596 + $0x30] sm:$0xff]
  %v604 = vld [vmem:[%s596 + $0x38] sm:$0xff]
  %v605 = vld [vmem:[%s596 + $0x40] sm:$0xff]
  %v606 = vld [vmem:[%s596 + $0x48] sm:$0xff]
  %v607 = vld [vmem:[%s596 + $0x50] sm:$0xff]
  %v608 = vld [vmem:[%s596 + $0x58] sm:$0xff]
  %v609 = vld [vmem:[%s596 + $0x60] sm:$0xff]
  %v610 = vld [vmem:[%s596 + $0x68] sm:$0xff]
  %v611 = vld [vmem:[%s596 + $0x70] sm:$0xff]
  %v612 = vld [vmem:[%s596 + $0x78] sm:$0xff]
  %v613 = vld [vmem:[%s5] sm:$0x1]
  %v615 = vperm.slane %v613, 0
  %v617 = vadd.f32 %v597, %v615
  %v618 = vadd.f32 %v598, %v615
  %v619 = vadd.f32 %v599, %v615
  %v620 = vadd.f32 %v600, %v615
  %v621 = vadd.f32 %v601, %v615
  %v622 = vadd.f32 %v602, %v615
  %v623 = vadd.f32 %v603, %v615
  %v624 = vadd.f32 %v604, %v615
  %v625 = vadd.f32 %v605, %v615
  %v626 = vadd.f32 %v606, %v615
  %v627 = vadd.f32 %v607, %v615
  %v628 = vadd.f32 %v608, %v615
  %v629 = vadd.f32 %v609, %v615
  %v630 = vadd.f32 %v610, %v615
  %v631 = vadd.f32 %v611, %v615
  %v632 = vadd.f32 %v612, %v615
  %v633 = vld [vmem:[%s6] sm:$0xf]
  %v634 = vld [vmem:[%s6 + $0x4] sm:$0xf]
  %v635 = vld [vmem:[%s6 + $0x8] sm:$0xf]
  %v636 = vld [vmem:[%s6 + $0xc] sm:$0xf]
  %v637 = vld [vmem:[%s6 + $0x10] sm:$0xf]
  %v638 = vld [vmem:[%s6 + $0x14] sm:$0xf]
  %v639 = vld [vmem:[%s6 + $0x18] sm:$0xf]
  %v640 = vld [vmem:[%s6 + $0x1c] sm:$0xf]
  %v641 = vld [vmem:[%s6 + $0x20] sm:$0xf]
  %v642 = vld [vmem:[%s6 + $0x24] sm:$0xf]
  %v643 = vld [vmem:[%s6 + $0x28] sm:$0xf]
  %v644 = vld [vmem:[%s6 + $0x2c] sm:$0xf]
  %v645 = vld [vmem:[%s6 + $0x30] sm:$0xf]
  %v646 = vld [vmem:[%s6 + $0x34] sm:$0xf]
  %v647 = vld [vmem:[%s6 + $0x38] sm:$0xf]
  %v648 = vld [vmem:[%s6 + $0x3c] sm:$0xf]
  %v649 = vld [vmem:[#allocation2] sm:$0xf]
  %v650 = vld [vmem:[#allocation2 + $0x4] sm:$0xf]
  %v651 = vld [vmem:[#allocation2 + $0x8] sm:$0xf]
  %v652 = vld [vmem:[#allocation2 + $0xc] sm:$0xf]
  %v653 = vld [vmem:[#allocation2 + $0x10] sm:$0xf]
  %v654 = vld [vmem:[#allocation2 + $0x14] sm:$0xf]
  %v655 = vld [vmem:[#allocation2 + $0x18] sm:$0xf]
  %v656 = vld [vmem:[#allocation2 + $0x1c] sm:$0xf]
  %v657 = vld [vmem:[#allocation2 + $0x20] sm:$0xf]
  %v658 = vld [vmem:[#allocation2 + $0x24] sm:$0xf]
  %v659 = vld [vmem:[#allocation2 + $0x28] sm:$0xf]
  %v660 = vld [vmem:[#allocation2 + $0x2c] sm:$0xf]
  %v661 = vld [vmem:[#allocation2 + $0x30] sm:$0xf]
  %v662 = vld [vmem:[#allocation2 + $0x34] sm:$0xf]
  %v663 = vld [vmem:[#allocation2 + $0x38] sm:$0xf]
  %v664 = vld [vmem:[#allocation2 + $0x3c] sm:$0xf]
  %v681 = vunpack.c.l.b16 %v633
  %v682 = vunpack.c.l.b16 %v634
  %v683 = vunpack.c.l.b16 %v635
  %v684 = vunpack.c.l.b16 %v636
  %v685 = vunpack.c.l.b16 %v637
  %v686 = vunpack.c.l.b16 %v638
  %v687 = vunpack.c.l.b16 %v639
  %v688 = vunpack.c.l.b16 %v640
  %v689 = vunpack.c.l.b16 %v641
  %v690 = vunpack.c.l.b16 %v642
  %v691 = vunpack.c.l.b16 %v643
  %v692 = vunpack.c.l.b16 %v644
  %v693 = vunpack.c.l.b16 %v645
  %v694 = vunpack.c.l.b16 %v646
  %v695 = vunpack.c.l.b16 %v647
  %v696 = vunpack.c.l.b16 %v648
  %v697 = vpack.c.b16 %v682, %v681
  %v698 = vpack.c.b16 %v684, %v683
  %v699 = vpack.c.b16 %v686, %v685
  %v700 = vpack.c.b16 %v688, %v687
  %v701 = vpack.c.b16 %v690, %v689
  %v702 = vpack.c.b16 %v692, %v691
  %v703 = vpack.c.b16 %v694, %v693
  %v704 = vpack.c.b16 %v696, %v695
  %v729 = vunpack.c.l.b16 %v649
  %v730 = vunpack.c.l.b16 %v650
  %v731 = vunpack.c.l.b16 %v651
  %v732 = vunpack.c.l.b16 %v652
  %v733 = vunpack.c.l.b16 %v653
  %v734 = vunpack.c.l.b16 %v654
  %v735 = vunpack.c.l.b16 %v655
  %v736 = vunpack.c.l.b16 %v656
  %v737 = vunpack.c.l.b16 %v657
  %v738 = vunpack.c.l.b16 %v658
  %v739 = vunpack.c.l.b16 %v659
  %v740 = vunpack.c.l.b16 %v660
  %v741 = vunpack.c.l.b16 %v661
  %v742 = vunpack.c.l.b16 %v662
  %v743 = vunpack.c.l.b16 %v663
  %v744 = vunpack.c.l.b16 %v664
  %v745 = vpack.c.b16 %v730, %v729
  %v746 = vpack.c.b16 %v732, %v731
  %v747 = vpack.c.b16 %v734, %v733
  %v748 = vpack.c.b16 %v736, %v735
  %v749 = vpack.c.b16 %v738, %v737
  %v750 = vpack.c.b16 %v740, %v739
  %v751 = vpack.c.b16 %v742, %v741
  %v752 = vpack.c.b16 %v744, %v743
  %761 = vmatpush.bf16.msra.mxu0 %v752
  %762 = vmatpush.bf16.msra.mxu0 %v751
  %763 = vmatpush.bf16.msra.mxu0 %v750
  %764 = vmatpush.bf16.msra.mxu0 %v749
  %765 = vmatpush.bf16.msra.mxu0 %v748
  %766 = vmatpush.bf16.msra.mxu0 %v747
  %767 = vmatpush.bf16.msra.mxu0 %v746
  %768 = vmatpush.bf16.msra.mxu0 %v745
  %769 = vmatmul.bf16.gmra.mxu0 %v697
  %v770 = vpop.f32.mrf.mxu0
  %v771 = vadd.f32 0.0, %v770
  %v772 = vpop.f32.mrf.mxu0
  %v773 = vadd.f32 0.0, %v772
  %774 = vmatmul.bf16.gmra.mxu0 %v698
  %v775 = vpop.f32.mrf.mxu0
  %v776 = vadd.f32 0.0, %v775
  %v777 = vpop.f32.mrf.mxu0
  %v778 = vadd.f32 0.0, %v777
  %779 = vmatmul.bf16.gmra.mxu0 %v699
  %v780 = vpop.f32.mrf.mxu0
  %v781 = vadd.f32 0.0, %v780
  %v782 = vpop.f32.mrf.mxu0
  %v783 = vadd.f32 0.0, %v782
  %784 = vmatmul.bf16.gmra.mxu0 %v700
  %v785 = vpop.f32.mrf.mxu0
  %v786 = vadd.f32 0.0, %v785
  %v787 = vpop.f32.mrf.mxu0
  %v788 = vadd.f32 0.0, %v787
  %789 = vmatmul.bf16.gmra.mxu0 %v701
  %v790 = vpop.f32.mrf.mxu0
  %v791 = vadd.f32 0.0, %v790
  %v792 = vpop.f32.mrf.mxu0
  %v793 = vadd.f32 0.0, %v792
  %794 = vmatmul.bf16.gmra.mxu0 %v702
  %v795 = vpop.f32.mrf.mxu0
  %v796 = vadd.f32 0.0, %v795
  %v797 = vpop.f32.mrf.mxu0
  %v798 = vadd.f32 0.0, %v797
  %799 = vmatmul.bf16.gmra.mxu0 %v703
  %v800 = vpop.f32.mrf.mxu0
  %v801 = vadd.f32 0.0, %v800
  %v802 = vpop.f32.mrf.mxu0
  %v803 = vadd.f32 0.0, %v802
  %804 = vmatmul.bf16.gmra.mxu0 %v704
  %v805 = vpop.f32.mrf.mxu0
  %v806 = vadd.f32 0.0, %v805
  %v807 = vpop.f32.mrf.mxu0
  %v808 = vadd.f32 0.0, %v807
  %809 = vdwg.mxu0
  %v810 = vadd.f32 %v617, %v771
  %v811 = vadd.f32 %v618, %v773
  %v812 = vadd.f32 %v619, %v776
  %v813 = vadd.f32 %v620, %v778
  %v814 = vadd.f32 %v621, %v781
  %v815 = vadd.f32 %v622, %v783
  %v816 = vadd.f32 %v623, %v786
  %v817 = vadd.f32 %v624, %v788
  %v818 = vadd.f32 %v625, %v791
  %v819 = vadd.f32 %v626, %v793
  %v820 = vadd.f32 %v627, %v796
  %v821 = vadd.f32 %v628, %v798
  %v822 = vadd.f32 %v629, %v801
  %v823 = vadd.f32 %v630, %v803
  %v824 = vadd.f32 %v631, %v806
  %v825 = vadd.f32 %v632, %v808
  %826 = vst [vmem:[%s7] sm:$0xff] %v810
  %827 = vst [vmem:[%s7 + $0x8] sm:$0xff] %v811
  %828 = vst [vmem:[%s7 + $0x10] sm:$0xff] %v812
  %829 = vst [vmem:[%s7 + $0x18] sm:$0xff] %v813
  %830 = vst [vmem:[%s7 + $0x20] sm:$0xff] %v814
  %831 = vst [vmem:[%s7 + $0x28] sm:$0xff] %v815
  %832 = vst [vmem:[%s7 + $0x30] sm:$0xff] %v816
  %833 = vst [vmem:[%s7 + $0x38] sm:$0xff] %v817
  %834 = vst [vmem:[%s7 + $0x40] sm:$0xff] %v818
  %835 = vst [vmem:[%s7 + $0x48] sm:$0xff] %v819
  %836 = vst [vmem:[%s7 + $0x50] sm:$0xff] %v820
  %837 = vst [vmem:[%s7 + $0x58] sm:$0xff] %v821
  %838 = vst [vmem:[%s7 + $0x60] sm:$0xff] %v822
  %839 = vst [vmem:[%s7 + $0x68] sm:$0xff] %v823
  %840 = vst [vmem:[%s7 + $0x70] sm:$0xff] %v824
  %841 = vst [vmem:[%s7 + $0x78] sm:$0xff] %v825
  // Predicated region
  $region34: #{deepgcn_forward.7} parent=0 // pred_check
    _
  $region35: #{deepgcn_forward.7} parent=0 // pred_check_branch
    %843 = sbr.rel (0) target = $region37
  $region36: #{deepgcn_forward.7} parent=0 // pred_region
    _
  $region37: #{deepgcn_forward.7} parent=0 // pred_fallthru
    _
  // Predicated region
  $region38: #{deepgcn_forward.7} parent=0 // pred_check
    _
  $region39: #{deepgcn_forward.7} parent=0 // pred_check_branch
    %845 = sbr.rel (0) target = $region41
  $region40: #{deepgcn_forward.7} parent=0 // pred_region
    _
  $region41: #{deepgcn_forward.7} parent=0 // pred_fallthru
    _

// kernel: deepgcn_forward.9
$region0: #{deepgcn_forward.9}
  #allocation0 [shape = 'u32[]', space=smem, size = 0x4, offset = 0x4, fixed_abs, tag = 'smem constant byte address 0x4 - core index']
  #allocation1 [shape = 'u32[72,128]{1,0:T(1,128)}', space=vmem, size = 0x9000, scoped, tag = 'internal scratch']
  %s0 = inlined_call_operand.vmem [shape: f32[1,128], index: 0, kind: input, shape index: {}]
  %s1 = inlined_call_operand.vmem [shape: f32[128,128], index: 1, kind: input, shape index: {}]
  %s2 = inlined_call_operand.vmem [shape: f32[1,128], index: 2, kind: input, shape index: {}]
  %s3 = inlined_call_operand.vmem [shape: f32[1,128], index: 3, kind: input, shape index: {}]
  %s4 = inlined_call_operand.vmem [shape: bf16[128,128], index: 4, kind: input, shape index: {}]
  %s5 = inlined_call_operand.vmem [shape: f32[1,128], index: 5, kind: input, shape index: {}]
  %s6 = inlined_call_operand.vmem [shape: f32[128,128], index: 6, kind: output, shape index: {}]
  %s7 = sld [smem:[#allocation0]]
  $region34: #{deepgcn_forward.9} parent=0
    _
  %s9 = ssub.s32 1, %s7
  %s10 = scalar_select 0, %s9, %s7
  // Predicated region
  $region2: #{deepgcn_forward.9} parent=0 // pred_check
    _
  $region3: #{deepgcn_forward.9} parent=0 // pred_check_branch
    %12 = sbr.rel (0) target = $region5
  $region4: #{deepgcn_forward.9} parent=0 // pred_region
    _
  $region5: #{deepgcn_forward.9} parent=0 // pred_fallthru
    _
  // Predicated region
  $region6: #{deepgcn_forward.9} parent=0 // pred_check
    _
  $region7: #{deepgcn_forward.9} parent=0 // pred_check_branch
    %14 = sbr.rel (0) target = $region9
  $region8: #{deepgcn_forward.9} parent=0 // pred_region
    _
  $region9: #{deepgcn_forward.9} parent=0 // pred_fallthru
    _
  // Predicated region
  $region10: #{deepgcn_forward.9} parent=0 // pred_check
    _
  $region11: #{deepgcn_forward.9} parent=0 // pred_check_branch
    %16 = sbr.rel (0) target = $region13
  $region12: #{deepgcn_forward.9} parent=0 // pred_region
    _
  $region13: #{deepgcn_forward.9} parent=0 // pred_fallthru
    _
  // Predicated region
  $region14: #{deepgcn_forward.9} parent=0 // pred_check
    _
  $region15: #{deepgcn_forward.9} parent=0 // pred_check_branch
    %18 = sbr.rel (0) target = $region17
  $region16: #{deepgcn_forward.9} parent=0 // pred_region
    _
  $region17: #{deepgcn_forward.9} parent=0 // pred_fallthru
    _
  // Predicated region
  $region18: #{deepgcn_forward.9} parent=0 // pred_check
    _
  $region19: #{deepgcn_forward.9} parent=0 // pred_check_branch
    %20 = sbr.rel (0) target = $region21
  $region20: #{deepgcn_forward.9} parent=0 // pred_region
    _
  $region21: #{deepgcn_forward.9} parent=0 // pred_fallthru
    _
  // Predicated region
  $region22: #{deepgcn_forward.9} parent=0 // pred_check
    _
  $region23: #{deepgcn_forward.9} parent=0 // pred_check_branch
    %22 = sbr.rel (0) target = $region25
  $region24: #{deepgcn_forward.9} parent=0 // pred_region
    _
  $region25: #{deepgcn_forward.9} parent=0 // pred_fallthru
    _
  %v23 = vld [vmem:[%s1] sm:$0xff]
  %v24 = vld [vmem:[%s1 + $0x8] sm:$0xff]
  %v25 = vld [vmem:[%s1 + $0x10] sm:$0xff]
  %v26 = vld [vmem:[%s1 + $0x18] sm:$0xff]
  %v27 = vld [vmem:[%s1 + $0x20] sm:$0xff]
  %v28 = vld [vmem:[%s1 + $0x28] sm:$0xff]
  %v29 = vld [vmem:[%s1 + $0x30] sm:$0xff]
  %v30 = vld [vmem:[%s1 + $0x38] sm:$0xff]
  %v31 = vld [vmem:[%s1 + $0x40] sm:$0xff]
  %v32 = vld [vmem:[%s1 + $0x48] sm:$0xff]
  %v33 = vld [vmem:[%s1 + $0x50] sm:$0xff]
  %v34 = vld [vmem:[%s1 + $0x58] sm:$0xff]
  %v35 = vld [vmem:[%s1 + $0x60] sm:$0xff]
  %v36 = vld [vmem:[%s1 + $0x68] sm:$0xff]
  %v37 = vld [vmem:[%s1 + $0x70] sm:$0xff]
  %v38 = vld [vmem:[%s1 + $0x78] sm:$0xff]
  %39 = vadd.xlane.f32.xlu0 %v23
  %v40 = vpop.xlane.xlu0 %39
  %41 = vadd.xlane.f32.xlu0 %v24
  %v42 = vpop.xlane.xlu0 %41
  %43 = vadd.xlane.f32.xlu0 %v25
  %v44 = vpop.xlane.xlu0 %43
  %45 = vadd.xlane.f32.xlu0 %v26
  %v46 = vpop.xlane.xlu0 %45
  %47 = vadd.xlane.f32.xlu0 %v27
  %v48 = vpop.xlane.xlu0 %47
  %49 = vadd.xlane.f32.xlu0 %v28
  %v50 = vpop.xlane.xlu0 %49
  %51 = vadd.xlane.f32.xlu0 %v29
  %v52 = vpop.xlane.xlu0 %51
  %53 = vadd.xlane.f32.xlu0 %v30
  %v54 = vpop.xlane.xlu0 %53
  %55 = vadd.xlane.f32.xlu0 %v31
  %v56 = vpop.xlane.xlu0 %55
  %57 = vadd.xlane.f32.xlu0 %v32
  %v58 = vpop.xlane.xlu0 %57
  %59 = vadd.xlane.f32.xlu0 %v33
  %v60 = vpop.xlane.xlu0 %59
  %61 = vadd.xlane.f32.xlu0 %v34
  %v62 = vpop.xlane.xlu0 %61
  %63 = vadd.xlane.f32.xlu0 %v35
  %v64 = vpop.xlane.xlu0 %63
  %65 = vadd.xlane.f32.xlu0 %v36
  %v66 = vpop.xlane.xlu0 %65
  %67 = vadd.xlane.f32.xlu0 %v37
  %v68 = vpop.xlane.xlu0 %67
  %69 = vadd.xlane.f32.xlu0 %v38
  %v70 = vpop.xlane.xlu0 %69
  %v71 = vmul.f32 %v40, 0.03125
  %v72 = vmul.f32 %v42, 0.03125
  %v73 = vmul.f32 %v44, 0.03125
  %v74 = vmul.f32 %v46, 0.03125
  %v75 = vmul.f32 %v48, 0.03125
  %v76 = vmul.f32 %v50, 0.03125
  %v77 = vmul.f32 %v52, 0.03125
  %v78 = vmul.f32 %v54, 0.03125
  %v79 = vmul.f32 %v56, 0.03125
  %v80 = vmul.f32 %v58, 0.03125
  %v81 = vmul.f32 %v60, 0.03125
  %v82 = vmul.f32 %v62, 0.03125
  %v83 = vmul.f32 %v64, 0.03125
  %v84 = vmul.f32 %v66, 0.03125
  %v85 = vmul.f32 %v68, 0.03125
  %v86 = vmul.f32 %v70, 0.03125
  %v87 = vsub.f32 %v23, %v71
  %v88 = vsub.f32 %v24, %v72
  %v89 = vsub.f32 %v25, %v73
  %v90 = vsub.f32 %v26, %v74
  %v91 = vsub.f32 %v27, %v75
  %v92 = vsub.f32 %v28, %v76
  %v93 = vsub.f32 %v29, %v77
  %v94 = vsub.f32 %v30, %v78
  %v95 = vsub.f32 %v31, %v79
  %v96 = vsub.f32 %v32, %v80
  %v97 = vsub.f32 %v33, %v81
  %v98 = vsub.f32 %v34, %v82
  %v99 = vsub.f32 %v35, %v83
  %v100 = vsub.f32 %v36, %v84
  %v101 = vsub.f32 %v37, %v85
  %v102 = vsub.f32 %v38, %v86
  %v103 = vld [vmem:[%s0] sm:$0x1]
  %v105 = vperm.slane %v103, 0
  %v107 = vmul.f32 %v87, %v105
  %v108 = vmul.f32 %v88, %v105
  %v109 = vmul.f32 %v89, %v105
  %v110 = vmul.f32 %v90, %v105
  %v111 = vmul.f32 %v91, %v105
  %v112 = vmul.f32 %v92, %v105
  %v113 = vmul.f32 %v93, %v105
  %v114 = vmul.f32 %v94, %v105
  %v115 = vmul.f32 %v95, %v105
  %v116 = vmul.f32 %v96, %v105
  %v117 = vmul.f32 %v97, %v105
  %v118 = vmul.f32 %v98, %v105
  %v119 = vmul.f32 %v99, %v105
  %v120 = vmul.f32 %v100, %v105
  %v121 = vmul.f32 %v101, %v105
  %v122 = vmul.f32 %v102, %v105
  %v123 = vmul.f32 %v107, %v107
  %v124 = vmul.f32 %v108, %v108
  %v125 = vmul.f32 %v109, %v109
  %v126 = vmul.f32 %v110, %v110
  %v127 = vmul.f32 %v111, %v111
  %v128 = vmul.f32 %v112, %v112
  %v129 = vmul.f32 %v113, %v113
  %v130 = vmul.f32 %v114, %v114
  %v131 = vmul.f32 %v115, %v115
  %v132 = vmul.f32 %v116, %v116
  %v133 = vmul.f32 %v117, %v117
  %v134 = vmul.f32 %v118, %v118
  %v135 = vmul.f32 %v119, %v119
  %v136 = vmul.f32 %v120, %v120
  %v137 = vmul.f32 %v121, %v121
  %v138 = vmul.f32 %v122, %v122
  %139 = vadd.xlane.f32.xlu0 %v123
  %v140 = vpop.xlane.xlu0 %139
  %141 = vadd.xlane.f32.xlu0 %v124
  %v142 = vpop.xlane.xlu0 %141
  %143 = vadd.xlane.f32.xlu0 %v125
  %v144 = vpop.xlane.xlu0 %143
  %145 = vadd.xlane.f32.xlu0 %v126
  %v146 = vpop.xlane.xlu0 %145
  %147 = vadd.xlane.f32.xlu0 %v127
  %v148 = vpop.xlane.xlu0 %147
  %149 = vadd.xlane.f32.xlu0 %v128
  %v150 = vpop.xlane.xlu0 %149
  %151 = vadd.xlane.f32.xlu0 %v129
  %v152 = vpop.xlane.xlu0 %151
  %153 = vadd.xlane.f32.xlu0 %v130
  %v154 = vpop.xlane.xlu0 %153
  %155 = vadd.xlane.f32.xlu0 %v131
  %v156 = vpop.xlane.xlu0 %155
  %157 = vadd.xlane.f32.xlu0 %v132
  %v158 = vpop.xlane.xlu0 %157
  %159 = vadd.xlane.f32.xlu0 %v133
  %v160 = vpop.xlane.xlu0 %159
  %161 = vadd.xlane.f32.xlu0 %v134
  %v162 = vpop.xlane.xlu0 %161
  %163 = vadd.xlane.f32.xlu0 %v135
  %v164 = vpop.xlane.xlu0 %163
  %165 = vadd.xlane.f32.xlu0 %v136
  %v166 = vpop.xlane.xlu0 %165
  %167 = vadd.xlane.f32.xlu0 %v137
  %v168 = vpop.xlane.xlu0 %167
  %169 = vadd.xlane.f32.xlu0 %v138
  %v170 = vpop.xlane.xlu0 %169
  %v171 = vmul.f32 %v140, 0.03125
  %v172 = vmul.f32 %v142, 0.03125
  %v173 = vmul.f32 %v144, 0.03125
  %v174 = vmul.f32 %v146, 0.03125
  %v175 = vmul.f32 %v148, 0.03125
  %v176 = vmul.f32 %v150, 0.03125
  %v177 = vmul.f32 %v152, 0.03125
  %v178 = vmul.f32 %v154, 0.03125
  %v179 = vmul.f32 %v156, 0.03125
  %v180 = vmul.f32 %v158, 0.03125
  %v181 = vmul.f32 %v160, 0.03125
  %v182 = vmul.f32 %v162, 0.03125
  %v183 = vmul.f32 %v164, 0.03125
  %v184 = vmul.f32 %v166, 0.03125
  %v185 = vmul.f32 %v168, 0.03125
  %v186 = vmul.f32 %v170, 0.03125
  %v187 = vadd.f32 %v171, 1e-05
  %v188 = vadd.f32 %v172, 1e-05
  %v189 = vadd.f32 %v173, 1e-05
  %v190 = vadd.f32 %v174, 1e-05
  %v191 = vadd.f32 %v175, 1e-05
  %v192 = vadd.f32 %v176, 1e-05
  %v193 = vadd.f32 %v177, 1e-05
  %v194 = vadd.f32 %v178, 1e-05
  %v195 = vadd.f32 %v179, 1e-05
  %v196 = vadd.f32 %v180, 1e-05
  %v197 = vadd.f32 %v181, 1e-05
  %v198 = vadd.f32 %v182, 1e-05
  %v199 = vadd.f32 %v183, 1e-05
  %v200 = vadd.f32 %v184, 1e-05
  %v201 = vadd.f32 %v185, 1e-05
  %v202 = vadd.f32 %v186, 1e-05
  %v203 = vrsqrt.pop %v187
  %v204 = vmul.f32 %v203, %v187
  %v205 = vmul.f32 %v204, %v203
  %v206 = vmul.f32 0.5, %v205
  %v207 = vsub.f32 1.5, %v206
  %v208 = vmul.f32 %v203, %v207
  %vm209 = vweird.f32 %v187
  %vm210 = vweird.f32 %v203
  %vm211 = vmor %vm209, %vm210
  %v212 = vsel %vm211, %v203, %v208
  %v213 = vrsqrt.pop %v188
  %v214 = vmul.f32 %v213, %v188
  %v215 = vmul.f32 %v214, %v213
  %v216 = vmul.f32 0.5, %v215
  %v217 = vsub.f32 1.5, %v216
  %v218 = vmul.f32 %v213, %v217
  %vm219 = vweird.f32 %v188
  %vm220 = vweird.f32 %v213
  %vm221 = vmor %vm219, %vm220
  %v222 = vsel %vm221, %v213, %v218
  %v223 = vrsqrt.pop %v189
  %v224 = vmul.f32 %v223, %v189
  %v225 = vmul.f32 %v224, %v223
  %v226 = vmul.f32 0.5, %v225
  %v227 = vsub.f32 1.5, %v226
  %v228 = vmul.f32 %v223, %v227
  %vm229 = vweird.f32 %v189
  %vm230 = vweird.f32 %v223
  %vm231 = vmor %vm229, %vm230
  %v232 = vsel %vm231, %v223, %v228
  %v233 = vrsqrt.pop %v190
  %v234 = vmul.f32 %v233, %v190
  %v235 = vmul.f32 %v234, %v233
  %v236 = vmul.f32 0.5, %v235
  %v237 = vsub.f32 1.5, %v236
  %v238 = vmul.f32 %v233, %v237
  %vm239 = vweird.f32 %v190
  %vm240 = vweird.f32 %v233
  %vm241 = vmor %vm239, %vm240
  %v242 = vsel %vm241, %v233, %v238
  %v243 = vrsqrt.pop %v191
  %v244 = vmul.f32 %v243, %v191
  %v245 = vmul.f32 %v244, %v243
  %v246 = vmul.f32 0.5, %v245
  %v247 = vsub.f32 1.5, %v246
  %v248 = vmul.f32 %v243, %v247
  %vm249 = vweird.f32 %v191
  %vm250 = vweird.f32 %v243
  %vm251 = vmor %vm249, %vm250
  %v252 = vsel %vm251, %v243, %v248
  %v253 = vrsqrt.pop %v192
  %v254 = vmul.f32 %v253, %v192
  %v255 = vmul.f32 %v254, %v253
  %v256 = vmul.f32 0.5, %v255
  %v257 = vsub.f32 1.5, %v256
  %v258 = vmul.f32 %v253, %v257
  %vm259 = vweird.f32 %v192
  %vm260 = vweird.f32 %v253
  %vm261 = vmor %vm259, %vm260
  %v262 = vsel %vm261, %v253, %v258
  %v263 = vrsqrt.pop %v193
  %v264 = vmul.f32 %v263, %v193
  %v265 = vmul.f32 %v264, %v263
  %v266 = vmul.f32 0.5, %v265
  %v267 = vsub.f32 1.5, %v266
  %v268 = vmul.f32 %v263, %v267
  %vm269 = vweird.f32 %v193
  %vm270 = vweird.f32 %v263
  %vm271 = vmor %vm269, %vm270
  %v272 = vsel %vm271, %v263, %v268
  %v273 = vrsqrt.pop %v194
  %v274 = vmul.f32 %v273, %v194
  %v275 = vmul.f32 %v274, %v273
  %v276 = vmul.f32 0.5, %v275
  %v277 = vsub.f32 1.5, %v276
  %v278 = vmul.f32 %v273, %v277
  %vm279 = vweird.f32 %v194
  %vm280 = vweird.f32 %v273
  %vm281 = vmor %vm279, %vm280
  %v282 = vsel %vm281, %v273, %v278
  %v283 = vrsqrt.pop %v195
  %v284 = vmul.f32 %v283, %v195
  %v285 = vmul.f32 %v284, %v283
  %v286 = vmul.f32 0.5, %v285
  %v287 = vsub.f32 1.5, %v286
  %v288 = vmul.f32 %v283, %v287
  %vm289 = vweird.f32 %v195
  %vm290 = vweird.f32 %v283
  %vm291 = vmor %vm289, %vm290
  %v292 = vsel %vm291, %v283, %v288
  %v293 = vrsqrt.pop %v196
  %v294 = vmul.f32 %v293, %v196
  %v295 = vmul.f32 %v294, %v293
  %v296 = vmul.f32 0.5, %v295
  %v297 = vsub.f32 1.5, %v296
  %v298 = vmul.f32 %v293, %v297
  %vm299 = vweird.f32 %v196
  %vm300 = vweird.f32 %v293
  %vm301 = vmor %vm299, %vm300
  %v302 = vsel %vm301, %v293, %v298
  %v303 = vrsqrt.pop %v197
  %v304 = vmul.f32 %v303, %v197
  %v305 = vmul.f32 %v304, %v303
  %v306 = vmul.f32 0.5, %v305
  %v307 = vsub.f32 1.5, %v306
  %v308 = vmul.f32 %v303, %v307
  %vm309 = vweird.f32 %v197
  %vm310 = vweird.f32 %v303
  %vm311 = vmor %vm309, %vm310
  %v312 = vsel %vm311, %v303, %v308
  %v313 = vrsqrt.pop %v198
  %v314 = vmul.f32 %v313, %v198
  %v315 = vmul.f32 %v314, %v313
  %v316 = vmul.f32 0.5, %v315
  %v317 = vsub.f32 1.5, %v316
  %v318 = vmul.f32 %v313, %v317
  %vm319 = vweird.f32 %v198
  %vm320 = vweird.f32 %v313
  %vm321 = vmor %vm319, %vm320
  %v322 = vsel %vm321, %v313, %v318
  %v323 = vrsqrt.pop %v199
  %v324 = vmul.f32 %v323, %v199
  %v325 = vmul.f32 %v324, %v323
  %v326 = vmul.f32 0.5, %v325
  %v327 = vsub.f32 1.5, %v326
  %v328 = vmul.f32 %v323, %v327
  %vm329 = vweird.f32 %v199
  %vm330 = vweird.f32 %v323
  %vm331 = vmor %vm329, %vm330
  %v332 = vsel %vm331, %v323, %v328
  %v333 = vrsqrt.pop %v200
  %v334 = vmul.f32 %v333, %v200
  %v335 = vmul.f32 %v334, %v333
  %v336 = vmul.f32 0.5, %v335
  %v337 = vsub.f32 1.5, %v336
  %v338 = vmul.f32 %v333, %v337
  %vm339 = vweird.f32 %v200
  %vm340 = vweird.f32 %v333
  %vm341 = vmor %vm339, %vm340
  %v342 = vsel %vm341, %v333, %v338
  %v343 = vrsqrt.pop %v201
  %v344 = vmul.f32 %v343, %v201
  %v345 = vmul.f32 %v344, %v343
  %v346 = vmul.f32 0.5, %v345
  %v347 = vsub.f32 1.5, %v346
  %v348 = vmul.f32 %v343, %v347
  %vm349 = vweird.f32 %v201
  %vm350 = vweird.f32 %v343
  %vm351 = vmor %vm349, %vm350
  %v352 = vsel %vm351, %v343, %v348
  %v353 = vrsqrt.pop %v202
  %v354 = vmul.f32 %v353, %v202
  %v355 = vmul.f32 %v354, %v353
  %v356 = vmul.f32 0.5, %v355
  %v357 = vsub.f32 1.5, %v356
  %v358 = vmul.f32 %v353, %v357
  %vm359 = vweird.f32 %v202
  %vm360 = vweird.f32 %v353
  %vm361 = vmor %vm359, %vm360
  %v362 = vsel %vm361, %v353, %v358
  %v363 = vmul.f32 %v107, %v212
  %v364 = vmul.f32 %v108, %v222
  %v365 = vmul.f32 %v109, %v232
  %v366 = vmul.f32 %v110, %v242
  %v367 = vmul.f32 %v111, %v252
  %v368 = vmul.f32 %v112, %v262
  %v369 = vmul.f32 %v113, %v272
  %v370 = vmul.f32 %v114, %v282
  %v371 = vmul.f32 %v115, %v292
  %v372 = vmul.f32 %v116, %v302
  %v373 = vmul.f32 %v117, %v312
  %v374 = vmul.f32 %v118, %v322
  %v375 = vmul.f32 %v119, %v332
  %v376 = vmul.f32 %v120, %v342
  %v377 = vmul.f32 %v121, %v352
  %v378 = vmul.f32 %v122, %v362
  %v379 = vld [vmem:[%s2] sm:$0x1]
  %v381 = vperm.slane %v379, 0
  %v383 = vmul.f32 %v363, %v381
  %v384 = vmul.f32 %v364, %v381
  %v385 = vmul.f32 %v365, %v381
  %v386 = vmul.f32 %v366, %v381
  %v387 = vmul.f32 %v367, %v381
  %v388 = vmul.f32 %v368, %v381
  %v389 = vmul.f32 %v369, %v381
  %v390 = vmul.f32 %v370, %v381
  %v391 = vmul.f32 %v371, %v381
  %v392 = vmul.f32 %v372, %v381
  %v393 = vmul.f32 %v373, %v381
  %v394 = vmul.f32 %v374, %v381
  %v395 = vmul.f32 %v375, %v381
  %v396 = vmul.f32 %v376, %v381
  %v397 = vmul.f32 %v377, %v381
  %v398 = vmul.f32 %v378, %v381
  %v399 = vld [vmem:[%s3] sm:$0x1]
  %v401 = vperm.slane %v399, 0
  %v403 = vadd.f32 %v383, %v401
  %v404 = vadd.f32 %v384, %v401
  %v405 = vadd.f32 %v385, %v401
  %v406 = vadd.f32 %v386, %v401
  %v407 = vadd.f32 %v387, %v401
  %v408 = vadd.f32 %v388, %v401
  %v409 = vadd.f32 %v389, %v401
  %v410 = vadd.f32 %v390, %v401
  %v411 = vadd.f32 %v391, %v401
  %v412 = vadd.f32 %v392, %v401
  %v413 = vadd.f32 %v393, %v401
  %v414 = vadd.f32 %v394, %v401
  %v415 = vadd.f32 %v395, %v401
  %v416 = vadd.f32 %v396, %v401
  %v417 = vadd.f32 %v397, %v401
  %v418 = vadd.f32 %v398, %v401
  %v419 = vmax.f32 %v403, 0.0
  %v420 = vmax.f32 %v404, 0.0
  %v421 = vmax.f32 %v405, 0.0
  %v422 = vmax.f32 %v406, 0.0
  %v423 = vmax.f32 %v407, 0.0
  %v424 = vmax.f32 %v408, 0.0
  %v425 = vmax.f32 %v409, 0.0
  %v426 = vmax.f32 %v410, 0.0
  %v427 = vmax.f32 %v411, 0.0
  %v428 = vmax.f32 %v412, 0.0
  %v429 = vmax.f32 %v413, 0.0
  %v430 = vmax.f32 %v414, 0.0
  %v431 = vmax.f32 %v415, 0.0
  %v432 = vmax.f32 %v416, 0.0
  %v433 = vmax.f32 %v417, 0.0
  %v434 = vmax.f32 %v418, 0.0
  %v435 = vpack.c.bf16 %v420, %v419
  %v436 = vpack.c.bf16 %v422, %v421
  %v437 = vpack.c.bf16 %v424, %v423
  %v438 = vpack.c.bf16 %v426, %v425
  %v439 = vpack.c.bf16 %v428, %v427
  %v440 = vpack.c.bf16 %v430, %v429
  %v441 = vpack.c.bf16 %v432, %v431
  %v442 = vpack.c.bf16 %v434, %v433
  %v443 = vld [vmem:[%s4] sm:$0xf]
  %v444 = vld [vmem:[%s4 + $0x4] sm:$0xf]
  %v445 = vld [vmem:[%s4 + $0x8] sm:$0xf]
  %v446 = vld [vmem:[%s4 + $0xc] sm:$0xf]
  %v447 = vld [vmem:[%s4 + $0x10] sm:$0xf]
  %v448 = vld [vmem:[%s4 + $0x14] sm:$0xf]
  %v449 = vld [vmem:[%s4 + $0x18] sm:$0xf]
  %v450 = vld [vmem:[%s4 + $0x1c] sm:$0xf]
  %v451 = vld [vmem:[%s4 + $0x20] sm:$0xf]
  %v452 = vld [vmem:[%s4 + $0x24] sm:$0xf]
  %v453 = vld [vmem:[%s4 + $0x28] sm:$0xf]
  %v454 = vld [vmem:[%s4 + $0x2c] sm:$0xf]
  %v455 = vld [vmem:[%s4 + $0x30] sm:$0xf]
  %v456 = vld [vmem:[%s4 + $0x34] sm:$0xf]
  %v457 = vld [vmem:[%s4 + $0x38] sm:$0xf]
  %v458 = vld [vmem:[%s4 + $0x3c] sm:$0xf]
  %v459 = vld [vmem:[%s5] sm:$0x1]
  %v461 = vperm.slane %v459, 0
  %v479 = vunpack.c.l.b16 %v443
  %v480 = vunpack.c.l.b16 %v444
  %v481 = vunpack.c.l.b16 %v445
  %v482 = vunpack.c.l.b16 %v446
  %v483 = vunpack.c.l.b16 %v447
  %v484 = vunpack.c.l.b16 %v448
  %v485 = vunpack.c.l.b16 %v449
  %v486 = vunpack.c.l.b16 %v450
  %v487 = vunpack.c.l.b16 %v451
  %v488 = vunpack.c.l.b16 %v452
  %v489 = vunpack.c.l.b16 %v453
  %v490 = vunpack.c.l.b16 %v454
  %v491 = vunpack.c.l.b16 %v455
  %v492 = vunpack.c.l.b16 %v456
  %v493 = vunpack.c.l.b16 %v457
  %v494 = vunpack.c.l.b16 %v458
  %v495 = vpack.c.b16 %v480, %v479
  %v496 = vpack.c.b16 %v482, %v481
  %v497 = vpack.c.b16 %v484, %v483
  %v498 = vpack.c.b16 %v486, %v485
  %v499 = vpack.c.b16 %v488, %v487
  %v500 = vpack.c.b16 %v490, %v489
  %v501 = vpack.c.b16 %v492, %v491
  %v502 = vpack.c.b16 %v494, %v493
  %511 = vmatpush.bf16.msra.mxu0 %v502
  %512 = vmatpush.bf16.msra.mxu0 %v501
  %513 = vmatpush.bf16.msra.mxu0 %v500
  %514 = vmatpush.bf16.msra.mxu0 %v499
  %515 = vmatpush.bf16.msra.mxu0 %v498
  %516 = vmatpush.bf16.msra.mxu0 %v497
  %517 = vmatpush.bf16.msra.mxu0 %v496
  %518 = vmatpush.bf16.msra.mxu0 %v495
  %519 = vmatmul.bf16.gmra.mxu0 %v435
  %v520 = vpop.f32.mrf.mxu0
  %v521 = vadd.f32 %v461, %v520
  %v522 = vpop.f32.mrf.mxu0
  %v523 = vadd.f32 %v461, %v522
  %524 = vmatmul.bf16.gmra.mxu0 %v436
  %v525 = vpop.f32.mrf.mxu0
  %v526 = vadd.f32 %v461, %v525
  %v527 = vpop.f32.mrf.mxu0
  %v528 = vadd.f32 %v461, %v527
  %529 = vmatmul.bf16.gmra.mxu0 %v437
  %v530 = vpop.f32.mrf.mxu0
  %v531 = vadd.f32 %v461, %v530
  %v532 = vpop.f32.mrf.mxu0
  %v533 = vadd.f32 %v461, %v532
  %534 = vmatmul.bf16.gmra.mxu0 %v438
  %v535 = vpop.f32.mrf.mxu0
  %v536 = vadd.f32 %v461, %v535
  %v537 = vpop.f32.mrf.mxu0
  %v538 = vadd.f32 %v461, %v537
  %539 = vmatmul.bf16.gmra.mxu0 %v439
  %v540 = vpop.f32.mrf.mxu0
  %v541 = vadd.f32 %v461, %v540
  %v542 = vpop.f32.mrf.mxu0
  %v543 = vadd.f32 %v461, %v542
  %544 = vmatmul.bf16.gmra.mxu0 %v440
  %v545 = vpop.f32.mrf.mxu0
  %v546 = vadd.f32 %v461, %v545
  %v547 = vpop.f32.mrf.mxu0
  %v548 = vadd.f32 %v461, %v547
  %549 = vmatmul.bf16.gmra.mxu0 %v441
  %v550 = vpop.f32.mrf.mxu0
  %v551 = vadd.f32 %v461, %v550
  %v552 = vpop.f32.mrf.mxu0
  %v553 = vadd.f32 %v461, %v552
  %554 = vmatmul.bf16.gmra.mxu0 %v442
  %v555 = vpop.f32.mrf.mxu0
  %v556 = vadd.f32 %v461, %v555
  %v557 = vpop.f32.mrf.mxu0
  %v558 = vadd.f32 %v461, %v557
  %559 = vdwg.mxu0
  %560 = vst [vmem:[%s6] sm:$0xff] %v521
  %561 = vst [vmem:[%s6 + $0x8] sm:$0xff] %v523
  %562 = vst [vmem:[%s6 + $0x10] sm:$0xff] %v526
  %563 = vst [vmem:[%s6 + $0x18] sm:$0xff] %v528
  %564 = vst [vmem:[%s6 + $0x20] sm:$0xff] %v531
  %565 = vst [vmem:[%s6 + $0x28] sm:$0xff] %v533
  %566 = vst [vmem:[%s6 + $0x30] sm:$0xff] %v536
  %567 = vst [vmem:[%s6 + $0x38] sm:$0xff] %v538
  %568 = vst [vmem:[%s6 + $0x40] sm:$0xff] %v541
  %569 = vst [vmem:[%s6 + $0x48] sm:$0xff] %v543
  %570 = vst [vmem:[%s6 + $0x50] sm:$0xff] %v546
  %571 = vst [vmem:[%s6 + $0x58] sm:$0xff] %v548
  %572 = vst [vmem:[%s6 + $0x60] sm:$0xff] %v551
  %573 = vst [vmem:[%s6 + $0x68] sm:$0xff] %v553
  %574 = vst [vmem:[%s6 + $0x70] sm:$0xff] %v556
  %575 = vst [vmem:[%s6 + $0x78] sm:$0xff] %v558
  // Predicated region
  $region26: #{deepgcn_forward.9} parent=0 // pred_check
    _
  $region27: #{deepgcn_forward.9} parent=0 // pred_check_branch
    %577 = sbr.rel (0) target = $region29
  $region28: #{deepgcn_forward.9} parent=0 // pred_region
    _
  $region29: #{deepgcn_forward.9} parent=0 // pred_fallthru
    _
  // Predicated region
  $region30: #{deepgcn_forward.9} parent=0 // pred_check
    _
  $region31: #{deepgcn_forward.9} parent=0 // pred_check_branch
    %579 = sbr.rel (0) target = $region33
  $region32: #{deepgcn_forward.9} parent=0 // pred_region
    _
  $region33: #{deepgcn_forward.9} parent=0 // pred_fallthru
    _

</llo_original>
